<compile_context>
chip_gen: v7x
topology: tpu7x:2x2x1
jax: 0.10.0
libtpu: 0.0.40
codegen_flags: <defaults>
</compile_context>

<pallas_src>
import numpy as np
import jax
import jax.numpy as jnp
from jax.experimental import pallas as pl
from jax.experimental.pallas import tpu as pltpu


def _count_b0s(b0s_mask):
    """Replicates the torch module's leading/trailing b0 counting."""
    b0s_mask = np.asarray(b0s_mask, dtype=bool)
    b0_before = 0
    while b0_before < len(b0s_mask) and b0s_mask[b0_before]:
        b0_before += 1
    b0_after = 0
    while b0_after < len(b0s_mask) and b0s_mask[-b0_after - 1]:
        b0_after += 1
    return b0_before, b0_after


def _padded_tile_bytes(rows, cols, itemsize):
    """VMEM footprint of one buffer of a (rows, cols) block, with (8,128) padding."""
    r = ((rows + 7) // 8) * 8
    c = ((cols + 127) // 128) * 128
    return r * c * itemsize


def _make_dwi_kernel(K, n_b0, b0_scale, b0_shift, mini, maxi):
    def dwi_kernel(x_ref, bt_ref, bias_ref, out_ref):
        # x_ref:    (TM, K+1)    raw SH coefficients, mean_b0 in lane K
        # bt_ref:   (K+1, n_out) f32: [zeros(:, :n_b0) | std[:,None]*B.T]; row K = 0
        # bias_ref: (1, n_out)   f32: [zeros(:, :n_b0) | mean @ B.T]
        # out_ref:  (TM, n_out)
        x = x_ref[...]
        b0 = x[:, K:K + 1].astype(jnp.float32) * b0_scale + b0_shift     # (TM, 1)
        raw = jnp.dot(x, bt_ref[...],
                      preferred_element_type=jnp.float32)                # MXU, (TM, n_out)
        raw = raw + bias_ref[...]                                        # folded SH affine
        vals = jnp.clip(raw, mini, maxi)
        if n_b0 > 0:
            # first n_b0 columns carry mean_b0 itself -> override to 1.0 before *b0.
            # mask is (1, n_out); only the select touches the full tile.
            col = jax.lax.broadcasted_iota(jnp.int32, (1, vals.shape[-1]), 1)
            vals = jnp.where(col < n_b0, jnp.float32(1.0), vals)
        out_ref[...] = (vals * b0).astype(out_ref.dtype)                 # single aligned store

    return dwi_kernel


def dwi_module(sh, mean_b0, B, b0s_mask, *, mean=None, std=None,
               b0_mean=None, b0_std=None, mini=0.001, maxi=0.999,
               tile_m=2048, sh_buffer_count=2):
    """sh: [..., n_sh], mean_b0: [..., 1], B: (n_grad, n_sh).

    Returns {'dwi': [..., b0_before + b0_after + n_grad]} matching the torch
    module (including its prepend-both-sides cat behaviour)."""
    lead = sh.shape[:-1]
    K = sh.shape[-1]
    G = B.shape[0]
    assert B.shape == (G, K), "B must be (n_grad, n_sh)"
    assert mean_b0.shape == lead + (1,), "mean_b0 must be [..., 1] matching sh"

    b0_before, b0_after = _count_b0s(b0s_mask)
    n_b0 = b0_before + b0_after
    n_out = n_b0 + G

    dtype = sh.dtype
    Kp1 = K + 1

    # ---- fold the SH affine into the (tiny) weight matrix, in f32 ----------
    bt = jnp.asarray(B, jnp.float32).T                      # (K, G)
    if mean is not None and std is not None:
        std32 = jnp.asarray(std, jnp.float32).reshape(K, 1)
        mean32 = jnp.asarray(mean, jnp.float32).reshape(1, K)
        bt_eff = std32 * bt                                 # (K, G)
        bias_dwi = mean32 @ bt                              # (1, G)
    else:
        bt_eff = bt
        bias_dwi = jnp.zeros((1, G), jnp.float32)

    # augmented weights: n_b0 zero columns in front, zero row for the b0 channel
    bt_aug = jnp.zeros((Kp1, n_out), jnp.float32).at[:K, n_b0:].set(bt_eff)
    bias = jnp.zeros((1, n_out), jnp.float32).at[:, n_b0:].set(bias_dwi)

    if b0_mean is not None and b0_std is not None:
        b0_scale, b0_shift = float(b0_std), float(b0_mean)
    else:
        b0_scale, b0_shift = 1.0, 0.0

    M = 1
    for d in lead:
        M *= d

    # single contiguous input [sh | mean_b0]: one wrapper-side concat replaces the
    # (tm, 1) block whose DMA degenerated into 4-byte lines at 512-byte stride.
    x = jnp.concatenate(
        [sh.reshape(M, K), mean_b0.reshape(M, 1).astype(dtype)], axis=-1)   # (M, K+1)

    # ---- tile selection ------------------------------------------------------
    if M <= tile_m:
        tm = M                                   # covers full array: any size legal
    else:
        nblocks = pl.cdiv(M, tile_m)
        if nblocks % 2:                          # keep an even grid for v7x's 2 TCs
            nblocks += 1
        tm = max(8, ((pl.cdiv(M, nblocks) + 7) // 8) * 8)   # sublane multiple of 8
    grid = (pl.cdiv(M, tm),)

    # ---- explicit VMEM budget from the (8,128)-padded working set -----------
    itemsize = jnp.dtype(dtype).itemsize
    n_in_buf = max(2, int(sh_buffer_count))
    vmem_bytes = (
        n_in_buf * _padded_tile_bytes(tm, Kp1, itemsize)
        + 2 * _padded_tile_bytes(tm, n_out, itemsize)
        + 2 * _padded_tile_bytes(Kp1, n_out, 4)
        + 2 * _padded_tile_bytes(1, n_out, 4)
        + (4 << 20)                              # headroom for compiler scratch
    )
    vmem_bytes = min(max(vmem_bytes, 16 << 20), 32 << 20)

    kernel = _make_dwi_kernel(K, n_b0, b0_scale, b0_shift, float(mini), float(maxi))

    x_spec_kwargs = {}
    if n_in_buf > 2:
        # v5e: deepen input pipelining only if profiling shows exposed DMA.
        x_spec_kwargs["pipeline_mode"] = pl.Buffered(n_in_buf)

    out = pl.pallas_call(
        kernel,
        out_shape=jax.ShapeDtypeStruct((M, n_out), dtype),
        grid_spec=pltpu.PrefetchScalarGridSpec(
            num_scalar_prefetch=0,
            grid=grid,
            in_specs=[
                pl.BlockSpec((tm, Kp1), lambda i: (i, 0), **x_spec_kwargs),
                pl.BlockSpec((Kp1, n_out), lambda i: (0, 0)),
                pl.BlockSpec((1, n_out), lambda i: (0, 0)),
            ],
            out_specs=pl.BlockSpec((tm, n_out), lambda i: (i, 0)),
        ),
        compiler_params=pltpu.CompilerParams(
            dimension_semantics=("parallel",),
            vmem_limit_bytes=int(vmem_bytes),
        ),
    )(x, bt_aug, bias)

    return {"dwi": out.reshape(lead + (n_out,))}


def dwi_reference(sh, mean_b0, B, b0s_mask, *, mean=None, std=None,
                  b0_mean=None, b0_std=None, mini=0.001, maxi=0.999):
    """Pure-JAX mirror of the torch forward (including the cat behaviour)."""
    if mean is not None and std is not None:
        sh = sh * jnp.asarray(std) + jnp.asarray(mean)
    if b0_mean is not None and b0_std is not None:
        mean_b0 = mean_b0 * b0_std + b0_mean
    dwi = jnp.einsum('...i,ij->...j', sh, jnp.asarray(B).T,
                     precision=jax.lax.Precision.HIGHEST)
    dwi = jnp.clip(dwi, mini, maxi)
    dwi = dwi * mean_b0
    b0_before, b0_after = _count_b0s(b0s_mask)
    if b0_before > 0:
        rep = jnp.broadcast_to(mean_b0, mean_b0.shape[:-1] + (b0_before,))
        dwi = jnp.concatenate([rep, dwi], axis=-1)
    if b0_after > 0:   # torch code prepends here too; keep identical semantics
        rep = jnp.broadcast_to(mean_b0, mean_b0.shape[:-1] + (b0_after,))
        dwi = jnp.concatenate([rep, dwi], axis=-1)
    return {"dwi": dwi}


if __name__ == "__main__":
    key = jax.random.PRNGKey(0)
    k = jax.random.split(key, 6)

    # small DWI-like shapes: batch=2, spatial 8x8x8, sh_order=4 -> 15 SH coeffs
    batch, X, Y, Z = 2, 8, 8, 8
    sh_order = 4
    n_sh = (sh_order + 1) * (sh_order + 2) // 2        # 15
    n_grad = 30                                        # non-b0 gradient dirs
    b0s_mask = np.zeros(1 + n_grad, dtype=bool)
    b0s_mask[0] = True                                 # one leading b0 volume

    Bmat = jax.random.uniform(k[0], (n_grad, n_sh), jnp.float32, -0.3, 0.3)
    sh = jax.random.uniform(k[1], (batch, X, Y, Z, n_sh), jnp.float32, -0.2, 0.2)
    mean_b0 = jax.random.uniform(k[2], (batch, X, Y, Z, 1), jnp.float32, 0.5, 1.5)
    mean = jax.random.uniform(k[3], (n_sh,), jnp.float32, -0.05, 0.05)
    std = jax.random.uniform(k[4], (n_sh,), jnp.float32, 0.8, 1.2)
    b0_mean = 0.1
    b0_std = 0.9

    out = dwi_module(sh, mean_b0, Bmat, b0s_mask,
                     mean=mean, std=std, b0_mean=b0_mean, b0_std=b0_std)
    dwi = jax.block_until_ready(out["dwi"])

    ref = dwi_reference(sh, mean_b0, Bmat, b0s_mask,
                        mean=mean, std=std, b0_mean=b0_mean, b0_std=b0_std)["dwi"]

    assert dwi.shape == (batch, X, Y, Z, 1 + n_grad), dwi.shape
    assert jnp.allclose(dwi, ref, atol=1e-4, rtol=1e-4)

    print("KERNEL_OK")
</pallas_src>

<mosaic_0001>
module attributes {stable_mosaic.version = 11 : i64} {
  func.func @dwi_kernel(%arg0: i32, %arg1: memref<1024x16xf32, #tpu.memory_space<vmem>>, %arg2: memref<16x31xf32, #tpu.memory_space<vmem>>, %arg3: memref<1x31xf32, #tpu.memory_space<vmem>>, %arg4: memref<1024x31xf32, #tpu.memory_space<vmem>>) attributes {dimension_semantics = [#tpu.dimension_semantics<parallel>], iteration_bounds = array<i64: 1>, scalar_prefetch = 0 : i64, scratch_operands = 0 : i64, tpu.core_type = #tpu.core_type<tc>, window_params = [{transform_indices = @transform_0, window_bounds = array<i64: 1024, 16>}, {pipeline_mode = #tpu.pipeline_mode<synchronous>, transform_indices = @transform_1, window_bounds = array<i64: 16, 31>}, {pipeline_mode = #tpu.pipeline_mode<synchronous>, transform_indices = @transform_2, window_bounds = array<i64: 1, 31>}, {transform_indices = @transform_3, window_bounds = array<i64: 1024, 31>}]} {
    %c0 = arith.constant 0 : index
    %c0_0 = arith.constant 0 : index
    %0 = vector.load %arg1[%c0, %c0_0] : memref<1024x16xf32, #tpu.memory_space<vmem>>, vector<1024x16xf32>
    %1 = vector.extract_strided_slice %0 {offsets = [0, 15], sizes = [1024, 1], strides = [1, 1]} : vector<1024x16xf32> to vector<1024x1xf32>
    %cst = arith.constant 0.899999976 : f32
    %2 = vector.broadcast %cst : f32 to vector<1024x1xf32>
    %3 = arith.mulf %1, %2 : vector<1024x1xf32>
    %cst_1 = arith.constant 1.000000e-01 : f32
    %4 = vector.broadcast %cst_1 : f32 to vector<1024x1xf32>
    %5 = arith.addf %3, %4 : vector<1024x1xf32>
    %c0_2 = arith.constant 0 : index
    %c0_3 = arith.constant 0 : index
    %6 = vector.load %arg2[%c0_2, %c0_3] : memref<16x31xf32, #tpu.memory_space<vmem>>, vector<16x31xf32>
    %cst_4 = arith.constant dense<0.000000e+00> : vector<1024x31xf32>
    %7 = tpu.matmul %0, %6, %cst_4 {dimension_numbers = #tpu.dot_dimension_numbers<[1], [0], [0], [1], [0, 0, 1, 1], [], []>} : vector<1024x16xf32>, vector<16x31xf32>, vector<1024x31xf32> -> vector<1024x31xf32>
    %c0_5 = arith.constant 0 : index
    %c0_6 = arith.constant 0 : index
    %8 = vector.load %arg3[%c0_5, %c0_6] : memref<1x31xf32, #tpu.memory_space<vmem>>, vector<1x31xf32>
    %9 = vector.broadcast %8 : vector<1x31xf32> to vector<1024x31xf32>
    %10 = arith.addf %7, %9 : vector<1024x31xf32>
    %cst_7 = arith.constant 1.000000e-03 : f32
    %cst_8 = arith.constant 9.990000e-01 : f32
    %11 = vector.broadcast %cst_7 : f32 to vector<1024x31xf32>
    %12 = arith.maximumf %11, %10 : vector<1024x31xf32>
    %13 = vector.broadcast %cst_8 : f32 to vector<1024x31xf32>
    %14 = arith.minimumf %13, %12 : vector<1024x31xf32>
    %15 = tpu.iota {dimensions = array<i32: 1>} : vector<1x31xi32>
    %c1_i32 = arith.constant 1 : i32
    %16 = vector.broadcast %c1_i32 : i32 to vector<1x31xi32>
    %17 = arith.cmpi slt, %15, %16 : vector<1x31xi32>
    %cst_9 = arith.constant 1.000000e+00 : f32
    %18 = vector.shape_cast %17 : vector<1x31xi1> to vector<1x31xi1>
    %19 = vector.broadcast %18 : vector<1x31xi1> to vector<1024x31xi1>
    %20 = vector.broadcast %cst_9 : f32 to vector<1024x31xf32>
    %21 = arith.select %19, %20, %14 : vector<1024x31xi1>, vector<1024x31xf32>
    %22 = vector.broadcast %5 : vector<1024x1xf32> to vector<1024x31xf32>
    %23 = arith.mulf %21, %22 : vector<1024x31xf32>
    %c0_10 = arith.constant 0 : index
    %c0_11 = arith.constant 0 : index
    %24 = vector.load %arg4[%c0_10, %c0_11] : memref<1024x31xf32, #tpu.memory_space<vmem>>, vector<1024x31xf32>
    tpu.vector_store %arg4[%c0_10, %c0_11], %23 {strides = array<i32>} : memref<1024x31xf32, #tpu.memory_space<vmem>>, vector<1024x31xf32>,
    return
  }
  func.func @transform_0(%arg0: i32) -> (i32, i32) {
    %c0_i32 = arith.constant 0 : i32
    %c0_i32_0 = arith.constant 0 : i32
    return %arg0, %c0_i32 : i32, i32
  }
  func.func @transform_1(%arg0: i32) -> (i32, i32) {
    %c0_i32 = arith.constant 0 : i32
    %c0_i32_0 = arith.constant 0 : i32
    %c0_i32_1 = arith.constant 0 : i32
    return %c0_i32, %c0_i32_0 : i32, i32
  }
  func.func @transform_2(%arg0: i32) -> (i32, i32) {
    %c0_i32 = arith.constant 0 : i32
    %c0_i32_0 = arith.constant 0 : i32
    %c0_i32_1 = arith.constant 0 : i32
    return %c0_i32, %c0_i32_0 : i32, i32
  }
  func.func @transform_3(%arg0: i32) -> (i32, i32) {
    %c0_i32 = arith.constant 0 : i32
    %c0_i32_0 = arith.constant 0 : i32
    return %arg0, %c0_i32 : i32, i32
  }
}

</mosaic_0001>

<llo_original>
// kernel: tpu_custom_call.1
$region0: #{tpu_custom_call.1}
  #allocation0 [shape = 'u32[]', space=smem, size = 0x4, offset = 0x4, fixed_abs, tag = 'smem constant byte address 0x4 - core index']
  #allocation1 [shape = 'u32[144,128]{1,0:T(1,128)}', space=vmem, size = 0x12000, scoped, tag = 'internal scratch']
  %s0 = inlined_call_operand.vmem [shape: f32[1024,16], index: 0, kind: input, shape index: {}]
  %s1 = inlined_call_operand.vmem [shape: f32[16,31], index: 1, kind: input, shape index: {}]
  %s2 = inlined_call_operand.vmem [shape: f32[1,31], index: 2, kind: input, shape index: {}]
  %s3 = inlined_call_operand.vmem [shape: f32[1024,31], index: 3, kind: output, shape index: {}]
  %s4 = sld [smem:[#allocation0]]
  $region22: #{tpu_custom_call.1} parent=0
    _
  %s6 = ssub.s32 1, %s4
  %s7 = scalar_select 0, %s6, %s4
  // Predicated region
  $region2: #{tpu_custom_call.1} parent=0 // pred_check
    _
  $region3: #{tpu_custom_call.1} parent=0 // pred_check_branch
    %9 = sbr.rel (0) target = $region5
  $region4: #{tpu_custom_call.1} parent=0 // pred_region
    _
  $region5: #{tpu_custom_call.1} parent=0 // pred_fallthru
    _
  // Predicated region
  $region6: #{tpu_custom_call.1} parent=0 // pred_check
    _
  $region7: #{tpu_custom_call.1} parent=0 // pred_check_branch
    %11 = sbr.rel (0) target = $region9
  $region8: #{tpu_custom_call.1} parent=0 // pred_region
    _
  $region9: #{tpu_custom_call.1} parent=0 // pred_fallthru
    _
  // Predicated region
  $region10: #{tpu_custom_call.1} parent=0 // pred_check
    _
  $region11: #{tpu_custom_call.1} parent=0 // pred_check_branch
    %13 = sbr.rel (0) target = $region13
  $region12: #{tpu_custom_call.1} parent=0 // pred_region
    _
  $region13: #{tpu_custom_call.1} parent=0 // pred_fallthru
    _
  %v14 = vld [vmem:[%s0] sm:$0xff]
  %v15 = vld [vmem:[%s0 + $0x8] sm:$0xff]
  %v16 = vld [vmem:[%s0 + $0x10] sm:$0xff]
  %v17 = vld [vmem:[%s0 + $0x18] sm:$0xff]
  %v18 = vld [vmem:[%s0 + $0x20] sm:$0xff]
  %v19 = vld [vmem:[%s0 + $0x28] sm:$0xff]
  %v20 = vld [vmem:[%s0 + $0x30] sm:$0xff]
  %v21 = vld [vmem:[%s0 + $0x38] sm:$0xff]
  %v22 = vld [vmem:[%s0 + $0x40] sm:$0xff]
  %v23 = vld [vmem:[%s0 + $0x48] sm:$0xff]
  %v24 = vld [vmem:[%s0 + $0x50] sm:$0xff]
  %v25 = vld [vmem:[%s0 + $0x58] sm:$0xff]
  %v26 = vld [vmem:[%s0 + $0x60] sm:$0xff]
  %v27 = vld [vmem:[%s0 + $0x68] sm:$0xff]
  %v28 = vld [vmem:[%s0 + $0x70] sm:$0xff]
  %v29 = vld [vmem:[%s0 + $0x78] sm:$0xff]
  %v30 = vld [vmem:[%s0 + $0x80] sm:$0xff]
  %v31 = vld [vmem:[%s0 + $0x88] sm:$0xff]
  %v32 = vld [vmem:[%s0 + $0x90] sm:$0xff]
  %v33 = vld [vmem:[%s0 + $0x98] sm:$0xff]
  %v34 = vld [vmem:[%s0 + $0xa0] sm:$0xff]
  %v35 = vld [vmem:[%s0 + $0xa8] sm:$0xff]
  %v36 = vld [vmem:[%s0 + $0xb0] sm:$0xff]
  %v37 = vld [vmem:[%s0 + $0xb8] sm:$0xff]
  %v38 = vld [vmem:[%s0 + $0xc0] sm:$0xff]
  %v39 = vld [vmem:[%s0 + $0xc8] sm:$0xff]
  %v40 = vld [vmem:[%s0 + $0xd0] sm:$0xff]
  %v41 = vld [vmem:[%s0 + $0xd8] sm:$0xff]
  %v42 = vld [vmem:[%s0 + $0xe0] sm:$0xff]
  %v43 = vld [vmem:[%s0 + $0xe8] sm:$0xff]
  %v44 = vld [vmem:[%s0 + $0xf0] sm:$0xff]
  %v45 = vld [vmem:[%s0 + $0xf8] sm:$0xff]
  %v46 = vld [vmem:[%s0 + $0x100] sm:$0xff]
  %v47 = vld [vmem:[%s0 + $0x108] sm:$0xff]
  %v48 = vld [vmem:[%s0 + $0x110] sm:$0xff]
  %v49 = vld [vmem:[%s0 + $0x118] sm:$0xff]
  %v50 = vld [vmem:[%s0 + $0x120] sm:$0xff]
  %v51 = vld [vmem:[%s0 + $0x128] sm:$0xff]
  %v52 = vld [vmem:[%s0 + $0x130] sm:$0xff]
  %v53 = vld [vmem:[%s0 + $0x138] sm:$0xff]
  %v54 = vld [vmem:[%s0 + $0x140] sm:$0xff]
  %v55 = vld [vmem:[%s0 + $0x148] sm:$0xff]
  %v56 = vld [vmem:[%s0 + $0x150] sm:$0xff]
  %v57 = vld [vmem:[%s0 + $0x158] sm:$0xff]
  %v58 = vld [vmem:[%s0 + $0x160] sm:$0xff]
  %v59 = vld [vmem:[%s0 + $0x168] sm:$0xff]
  %v60 = vld [vmem:[%s0 + $0x170] sm:$0xff]
  %v61 = vld [vmem:[%s0 + $0x178] sm:$0xff]
  %v62 = vld [vmem:[%s0 + $0x180] sm:$0xff]
  %v63 = vld [vmem:[%s0 + $0x188] sm:$0xff]
  %v64 = vld [vmem:[%s0 + $0x190] sm:$0xff]
  %v65 = vld [vmem:[%s0 + $0x198] sm:$0xff]
  %v66 = vld [vmem:[%s0 + $0x1a0] sm:$0xff]
  %v67 = vld [vmem:[%s0 + $0x1a8] sm:$0xff]
  %v68 = vld [vmem:[%s0 + $0x1b0] sm:$0xff]
  %v69 = vld [vmem:[%s0 + $0x1b8] sm:$0xff]
  %v70 = vld [vmem:[%s0 + $0x1c0] sm:$0xff]
  %v71 = vld [vmem:[%s0 + $0x1c8] sm:$0xff]
  %v72 = vld [vmem:[%s0 + $0x1d0] sm:$0xff]
  %v73 = vld [vmem:[%s0 + $0x1d8] sm:$0xff]
  %v74 = vld [vmem:[%s0 + $0x1e0] sm:$0xff]
  %v75 = vld [vmem:[%s0 + $0x1e8] sm:$0xff]
  %v76 = vld [vmem:[%s0 + $0x1f0] sm:$0xff]
  %v77 = vld [vmem:[%s0 + $0x1f8] sm:$0xff]
  %v78 = vld [vmem:[%s0 + $0x200] sm:$0xff]
  %v79 = vld [vmem:[%s0 + $0x208] sm:$0xff]
  %v80 = vld [vmem:[%s0 + $0x210] sm:$0xff]
  %v81 = vld [vmem:[%s0 + $0x218] sm:$0xff]
  %v82 = vld [vmem:[%s0 + $0x220] sm:$0xff]
  %v83 = vld [vmem:[%s0 + $0x228] sm:$0xff]
  %v84 = vld [vmem:[%s0 + $0x230] sm:$0xff]
  %v85 = vld [vmem:[%s0 + $0x238] sm:$0xff]
  %v86 = vld [vmem:[%s0 + $0x240] sm:$0xff]
  %v87 = vld [vmem:[%s0 + $0x248] sm:$0xff]
  %v88 = vld [vmem:[%s0 + $0x250] sm:$0xff]
  %v89 = vld [vmem:[%s0 + $0x258] sm:$0xff]
  %v90 = vld [vmem:[%s0 + $0x260] sm:$0xff]
  %v91 = vld [vmem:[%s0 + $0x268] sm:$0xff]
  %v92 = vld [vmem:[%s0 + $0x270] sm:$0xff]
  %v93 = vld [vmem:[%s0 + $0x278] sm:$0xff]
  %v94 = vld [vmem:[%s0 + $0x280] sm:$0xff]
  %v95 = vld [vmem:[%s0 + $0x288] sm:$0xff]
  %v96 = vld [vmem:[%s0 + $0x290] sm:$0xff]
  %v97 = vld [vmem:[%s0 + $0x298] sm:$0xff]
  %v98 = vld [vmem:[%s0 + $0x2a0] sm:$0xff]
  %v99 = vld [vmem:[%s0 + $0x2a8] sm:$0xff]
  %v100 = vld [vmem:[%s0 + $0x2b0] sm:$0xff]
  %v101 = vld [vmem:[%s0 + $0x2b8] sm:$0xff]
  %v102 = vld [vmem:[%s0 + $0x2c0] sm:$0xff]
  %v103 = vld [vmem:[%s0 + $0x2c8] sm:$0xff]
  %v104 = vld [vmem:[%s0 + $0x2d0] sm:$0xff]
  %v105 = vld [vmem:[%s0 + $0x2d8] sm:$0xff]
  %v106 = vld [vmem:[%s0 + $0x2e0] sm:$0xff]
  %v107 = vld [vmem:[%s0 + $0x2e8] sm:$0xff]
  %v108 = vld [vmem:[%s0 + $0x2f0] sm:$0xff]
  %v109 = vld [vmem:[%s0 + $0x2f8] sm:$0xff]
  %v110 = vld [vmem:[%s0 + $0x300] sm:$0xff]
  %v111 = vld [vmem:[%s0 + $0x308] sm:$0xff]
  %v112 = vld [vmem:[%s0 + $0x310] sm:$0xff]
  %v113 = vld [vmem:[%s0 + $0x318] sm:$0xff]
  %v114 = vld [vmem:[%s0 + $0x320] sm:$0xff]
  %v115 = vld [vmem:[%s0 + $0x328] sm:$0xff]
  %v116 = vld [vmem:[%s0 + $0x330] sm:$0xff]
  %v117 = vld [vmem:[%s0 + $0x338] sm:$0xff]
  %v118 = vld [vmem:[%s0 + $0x340] sm:$0xff]
  %v119 = vld [vmem:[%s0 + $0x348] sm:$0xff]
  %v120 = vld [vmem:[%s0 + $0x350] sm:$0xff]
  %v121 = vld [vmem:[%s0 + $0x358] sm:$0xff]
  %v122 = vld [vmem:[%s0 + $0x360] sm:$0xff]
  %v123 = vld [vmem:[%s0 + $0x368] sm:$0xff]
  %v124 = vld [vmem:[%s0 + $0x370] sm:$0xff]
  %v125 = vld [vmem:[%s0 + $0x378] sm:$0xff]
  %v126 = vld [vmem:[%s0 + $0x380] sm:$0xff]
  %v127 = vld [vmem:[%s0 + $0x388] sm:$0xff]
  %v128 = vld [vmem:[%s0 + $0x390] sm:$0xff]
  %v129 = vld [vmem:[%s0 + $0x398] sm:$0xff]
  %v130 = vld [vmem:[%s0 + $0x3a0] sm:$0xff]
  %v131 = vld [vmem:[%s0 + $0x3a8] sm:$0xff]
  %v132 = vld [vmem:[%s0 + $0x3b0] sm:$0xff]
  %v133 = vld [vmem:[%s0 + $0x3b8] sm:$0xff]
  %v134 = vld [vmem:[%s0 + $0x3c0] sm:$0xff]
  %v135 = vld [vmem:[%s0 + $0x3c8] sm:$0xff]
  %v136 = vld [vmem:[%s0 + $0x3d0] sm:$0xff]
  %v137 = vld [vmem:[%s0 + $0x3d8] sm:$0xff]
  %v138 = vld [vmem:[%s0 + $0x3e0] sm:$0xff]
  %v139 = vld [vmem:[%s0 + $0x3e8] sm:$0xff]
  %v140 = vld [vmem:[%s0 + $0x3f0] sm:$0xff]
  %v141 = vld [vmem:[%s0 + $0x3f8] sm:$0xff]
  %v142 = vmul.f32 %v14, 0.9
  %v143 = vmul.f32 %v15, 0.9
  %v144 = vmul.f32 %v16, 0.9
  %v145 = vmul.f32 %v17, 0.9
  %v146 = vmul.f32 %v18, 0.9
  %v147 = vmul.f32 %v19, 0.9
  %v148 = vmul.f32 %v20, 0.9
  %v149 = vmul.f32 %v21, 0.9
  %v150 = vmul.f32 %v22, 0.9
  %v151 = vmul.f32 %v23, 0.9
  %v152 = vmul.f32 %v24, 0.9
  %v153 = vmul.f32 %v25, 0.9
  %v154 = vmul.f32 %v26, 0.9
  %v155 = vmul.f32 %v27, 0.9
  %v156 = vmul.f32 %v28, 0.9
  %v157 = vmul.f32 %v29, 0.9
  %v158 = vmul.f32 %v30, 0.9
  %v159 = vmul.f32 %v31, 0.9
  %v160 = vmul.f32 %v32, 0.9
  %v161 = vmul.f32 %v33, 0.9
  %v162 = vmul.f32 %v34, 0.9
  %v163 = vmul.f32 %v35, 0.9
  %v164 = vmul.f32 %v36, 0.9
  %v165 = vmul.f32 %v37, 0.9
  %v166 = vmul.f32 %v38, 0.9
  %v167 = vmul.f32 %v39, 0.9
  %v168 = vmul.f32 %v40, 0.9
  %v169 = vmul.f32 %v41, 0.9
  %v170 = vmul.f32 %v42, 0.9
  %v171 = vmul.f32 %v43, 0.9
  %v172 = vmul.f32 %v44, 0.9
  %v173 = vmul.f32 %v45, 0.9
  %v174 = vmul.f32 %v46, 0.9
  %v175 = vmul.f32 %v47, 0.9
  %v176 = vmul.f32 %v48, 0.9
  %v177 = vmul.f32 %v49, 0.9
  %v178 = vmul.f32 %v50, 0.9
  %v179 = vmul.f32 %v51, 0.9
  %v180 = vmul.f32 %v52, 0.9
  %v181 = vmul.f32 %v53, 0.9
  %v182 = vmul.f32 %v54, 0.9
  %v183 = vmul.f32 %v55, 0.9
  %v184 = vmul.f32 %v56, 0.9
  %v185 = vmul.f32 %v57, 0.9
  %v186 = vmul.f32 %v58, 0.9
  %v187 = vmul.f32 %v59, 0.9
  %v188 = vmul.f32 %v60, 0.9
  %v189 = vmul.f32 %v61, 0.9
  %v190 = vmul.f32 %v62, 0.9
  %v191 = vmul.f32 %v63, 0.9
  %v192 = vmul.f32 %v64, 0.9
  %v193 = vmul.f32 %v65, 0.9
  %v194 = vmul.f32 %v66, 0.9
  %v195 = vmul.f32 %v67, 0.9
  %v196 = vmul.f32 %v68, 0.9
  %v197 = vmul.f32 %v69, 0.9
  %v198 = vmul.f32 %v70, 0.9
  %v199 = vmul.f32 %v71, 0.9
  %v200 = vmul.f32 %v72, 0.9
  %v201 = vmul.f32 %v73, 0.9
  %v202 = vmul.f32 %v74, 0.9
  %v203 = vmul.f32 %v75, 0.9
  %v204 = vmul.f32 %v76, 0.9
  %v205 = vmul.f32 %v77, 0.9
  %v206 = vmul.f32 %v78, 0.9
  %v207 = vmul.f32 %v79, 0.9
  %v208 = vmul.f32 %v80, 0.9
  %v209 = vmul.f32 %v81, 0.9
  %v210 = vmul.f32 %v82, 0.9
  %v211 = vmul.f32 %v83, 0.9
  %v212 = vmul.f32 %v84, 0.9
  %v213 = vmul.f32 %v85, 0.9
  %v214 = vmul.f32 %v86, 0.9
  %v215 = vmul.f32 %v87, 0.9
  %v216 = vmul.f32 %v88, 0.9
  %v217 = vmul.f32 %v89, 0.9
  %v218 = vmul.f32 %v90, 0.9
  %v219 = vmul.f32 %v91, 0.9
  %v220 = vmul.f32 %v92, 0.9
  %v221 = vmul.f32 %v93, 0.9
  %v222 = vmul.f32 %v94, 0.9
  %v223 = vmul.f32 %v95, 0.9
  %v224 = vmul.f32 %v96, 0.9
  %v225 = vmul.f32 %v97, 0.9
  %v226 = vmul.f32 %v98, 0.9
  %v227 = vmul.f32 %v99, 0.9
  %v228 = vmul.f32 %v100, 0.9
  %v229 = vmul.f32 %v101, 0.9
  %v230 = vmul.f32 %v102, 0.9
  %v231 = vmul.f32 %v103, 0.9
  %v232 = vmul.f32 %v104, 0.9
  %v233 = vmul.f32 %v105, 0.9
  %v234 = vmul.f32 %v106, 0.9
  %v235 = vmul.f32 %v107, 0.9
  %v236 = vmul.f32 %v108, 0.9
  %v237 = vmul.f32 %v109, 0.9
  %v238 = vmul.f32 %v110, 0.9
  %v239 = vmul.f32 %v111, 0.9
  %v240 = vmul.f32 %v112, 0.9
  %v241 = vmul.f32 %v113, 0.9
  %v242 = vmul.f32 %v114, 0.9
  %v243 = vmul.f32 %v115, 0.9
  %v244 = vmul.f32 %v116, 0.9
  %v245 = vmul.f32 %v117, 0.9
  %v246 = vmul.f32 %v118, 0.9
  %v247 = vmul.f32 %v119, 0.9
  %v248 = vmul.f32 %v120, 0.9
  %v249 = vmul.f32 %v121, 0.9
  %v250 = vmul.f32 %v122, 0.9
  %v251 = vmul.f32 %v123, 0.9
  %v252 = vmul.f32 %v124, 0.9
  %v253 = vmul.f32 %v125, 0.9
  %v254 = vmul.f32 %v126, 0.9
  %v255 = vmul.f32 %v127, 0.9
  %v256 = vmul.f32 %v128, 0.9
  %v257 = vmul.f32 %v129, 0.9
  %v258 = vmul.f32 %v130, 0.9
  %v259 = vmul.f32 %v131, 0.9
  %v260 = vmul.f32 %v132, 0.9
  %v261 = vmul.f32 %v133, 0.9
  %v262 = vmul.f32 %v134, 0.9
  %v263 = vmul.f32 %v135, 0.9
  %v264 = vmul.f32 %v136, 0.9
  %v265 = vmul.f32 %v137, 0.9
  %v266 = vmul.f32 %v138, 0.9
  %v267 = vmul.f32 %v139, 0.9
  %v268 = vmul.f32 %v140, 0.9
  %v269 = vmul.f32 %v141, 0.9
  %v270 = vadd.f32 %v142, 0.1
  %v271 = vadd.f32 %v143, 0.1
  %v272 = vadd.f32 %v144, 0.1
  %v273 = vadd.f32 %v145, 0.1
  %v274 = vadd.f32 %v146, 0.1
  %v275 = vadd.f32 %v147, 0.1
  %v276 = vadd.f32 %v148, 0.1
  %v277 = vadd.f32 %v149, 0.1
  %v278 = vadd.f32 %v150, 0.1
  %v279 = vadd.f32 %v151, 0.1
  %v280 = vadd.f32 %v152, 0.1
  %v281 = vadd.f32 %v153, 0.1
  %v282 = vadd.f32 %v154, 0.1
  %v283 = vadd.f32 %v155, 0.1
  %v284 = vadd.f32 %v156, 0.1
  %v285 = vadd.f32 %v157, 0.1
  %v286 = vadd.f32 %v158, 0.1
  %v287 = vadd.f32 %v159, 0.1
  %v288 = vadd.f32 %v160, 0.1
  %v289 = vadd.f32 %v161, 0.1
  %v290 = vadd.f32 %v162, 0.1
  %v291 = vadd.f32 %v163, 0.1
  %v292 = vadd.f32 %v164, 0.1
  %v293 = vadd.f32 %v165, 0.1
  %v294 = vadd.f32 %v166, 0.1
  %v295 = vadd.f32 %v167, 0.1
  %v296 = vadd.f32 %v168, 0.1
  %v297 = vadd.f32 %v169, 0.1
  %v298 = vadd.f32 %v170, 0.1
  %v299 = vadd.f32 %v171, 0.1
  %v300 = vadd.f32 %v172, 0.1
  %v301 = vadd.f32 %v173, 0.1
  %v302 = vadd.f32 %v174, 0.1
  %v303 = vadd.f32 %v175, 0.1
  %v304 = vadd.f32 %v176, 0.1
  %v305 = vadd.f32 %v177, 0.1
  %v306 = vadd.f32 %v178, 0.1
  %v307 = vadd.f32 %v179, 0.1
  %v308 = vadd.f32 %v180, 0.1
  %v309 = vadd.f32 %v181, 0.1
  %v310 = vadd.f32 %v182, 0.1
  %v311 = vadd.f32 %v183, 0.1
  %v312 = vadd.f32 %v184, 0.1
  %v313 = vadd.f32 %v185, 0.1
  %v314 = vadd.f32 %v186, 0.1
  %v315 = vadd.f32 %v187, 0.1
  %v316 = vadd.f32 %v188, 0.1
  %v317 = vadd.f32 %v189, 0.1
  %v318 = vadd.f32 %v190, 0.1
  %v319 = vadd.f32 %v191, 0.1
  %v320 = vadd.f32 %v192, 0.1
  %v321 = vadd.f32 %v193, 0.1
  %v322 = vadd.f32 %v194, 0.1
  %v323 = vadd.f32 %v195, 0.1
  %v324 = vadd.f32 %v196, 0.1
  %v325 = vadd.f32 %v197, 0.1
  %v326 = vadd.f32 %v198, 0.1
  %v327 = vadd.f32 %v199, 0.1
  %v328 = vadd.f32 %v200, 0.1
  %v329 = vadd.f32 %v201, 0.1
  %v330 = vadd.f32 %v202, 0.1
  %v331 = vadd.f32 %v203, 0.1
  %v332 = vadd.f32 %v204, 0.1
  %v333 = vadd.f32 %v205, 0.1
  %v334 = vadd.f32 %v206, 0.1
  %v335 = vadd.f32 %v207, 0.1
  %v336 = vadd.f32 %v208, 0.1
  %v337 = vadd.f32 %v209, 0.1
  %v338 = vadd.f32 %v210, 0.1
  %v339 = vadd.f32 %v211, 0.1
  %v340 = vadd.f32 %v212, 0.1
  %v341 = vadd.f32 %v213, 0.1
  %v342 = vadd.f32 %v214, 0.1
  %v343 = vadd.f32 %v215, 0.1
  %v344 = vadd.f32 %v216, 0.1
  %v345 = vadd.f32 %v217, 0.1
  %v346 = vadd.f32 %v218, 0.1
  %v347 = vadd.f32 %v219, 0.1
  %v348 = vadd.f32 %v220, 0.1
  %v349 = vadd.f32 %v221, 0.1
  %v350 = vadd.f32 %v222, 0.1
  %v351 = vadd.f32 %v223, 0.1
  %v352 = vadd.f32 %v224, 0.1
  %v353 = vadd.f32 %v225, 0.1
  %v354 = vadd.f32 %v226, 0.1
  %v355 = vadd.f32 %v227, 0.1
  %v356 = vadd.f32 %v228, 0.1
  %v357 = vadd.f32 %v229, 0.1
  %v358 = vadd.f32 %v230, 0.1
  %v359 = vadd.f32 %v231, 0.1
  %v360 = vadd.f32 %v232, 0.1
  %v361 = vadd.f32 %v233, 0.1
  %v362 = vadd.f32 %v234, 0.1
  %v363 = vadd.f32 %v235, 0.1
  %v364 = vadd.f32 %v236, 0.1
  %v365 = vadd.f32 %v237, 0.1
  %v366 = vadd.f32 %v238, 0.1
  %v367 = vadd.f32 %v239, 0.1
  %v368 = vadd.f32 %v240, 0.1
  %v369 = vadd.f32 %v241, 0.1
  %v370 = vadd.f32 %v242, 0.1
  %v371 = vadd.f32 %v243, 0.1
  %v372 = vadd.f32 %v244, 0.1
  %v373 = vadd.f32 %v245, 0.1
  %v374 = vadd.f32 %v246, 0.1
  %v375 = vadd.f32 %v247, 0.1
  %v376 = vadd.f32 %v248, 0.1
  %v377 = vadd.f32 %v249, 0.1
  %v378 = vadd.f32 %v250, 0.1
  %v379 = vadd.f32 %v251, 0.1
  %v380 = vadd.f32 %v252, 0.1
  %v381 = vadd.f32 %v253, 0.1
  %v382 = vadd.f32 %v254, 0.1
  %v383 = vadd.f32 %v255, 0.1
  %v384 = vadd.f32 %v256, 0.1
  %v385 = vadd.f32 %v257, 0.1
  %v386 = vadd.f32 %v258, 0.1
  %v387 = vadd.f32 %v259, 0.1
  %v388 = vadd.f32 %v260, 0.1
  %v389 = vadd.f32 %v261, 0.1
  %v390 = vadd.f32 %v262, 0.1
  %v391 = vadd.f32 %v263, 0.1
  %v392 = vadd.f32 %v264, 0.1
  %v393 = vadd.f32 %v265, 0.1
  %v394 = vadd.f32 %v266, 0.1
  %v395 = vadd.f32 %v267, 0.1
  %v396 = vadd.f32 %v268, 0.1
  %v397 = vadd.f32 %v269, 0.1
  %v398 = vld [vmem:[%s1] sm:$0xff]
  %v399 = vld [vmem:[%s1 + $0x8] sm:$0xff]
  %v400 = vld [vmem:[%s2] sm:$0x1]
  %v402 = vlaneseq
  %v403 = vshrl.u32 %v402, 7
  %v404 = vsub.s32 0, %v403
  %v405 = vrot.slane %v400, %v404
  %vm407 = vcmask 130048
  %v409 = vsel %vm407, %v14, 0
  %v412 = vsel %vm407, %v15, 0
  %v415 = vsel %vm407, %v16, 0
  %v418 = vsel %vm407, %v17, 0
  %v421 = vsel %vm407, %v18, 0
  %v424 = vsel %vm407, %v19, 0
  %v427 = vsel %vm407, %v20, 0
  %v430 = vsel %vm407, %v21, 0
  %v433 = vsel %vm407, %v22, 0
  %v436 = vsel %vm407, %v23, 0
  %v439 = vsel %vm407, %v24, 0
  %v442 = vsel %vm407, %v25, 0
  %v445 = vsel %vm407, %v26, 0
  %v448 = vsel %vm407, %v27, 0
  %v451 = vsel %vm407, %v28, 0
  %v454 = vsel %vm407, %v29, 0
  %v457 = vsel %vm407, %v30, 0
  %v460 = vsel %vm407, %v31, 0
  %v463 = vsel %vm407, %v32, 0
  %v466 = vsel %vm407, %v33, 0
  %v469 = vsel %vm407, %v34, 0
  %v472 = vsel %vm407, %v35, 0
  %v475 = vsel %vm407, %v36, 0
  %v478 = vsel %vm407, %v37, 0
  %v481 = vsel %vm407, %v38, 0
  %v484 = vsel %vm407, %v39, 0
  %v487 = vsel %vm407, %v40, 0
  %v490 = vsel %vm407, %v41, 0
  %v493 = vsel %vm407, %v42, 0
  %v496 = vsel %vm407, %v43, 0
  %v499 = vsel %vm407, %v44, 0
  %v502 = vsel %vm407, %v45, 0
  %v505 = vsel %vm407, %v46, 0
  %v508 = vsel %vm407, %v47, 0
  %v511 = vsel %vm407, %v48, 0
  %v514 = vsel %vm407, %v49, 0
  %v517 = vsel %vm407, %v50, 0
  %v520 = vsel %vm407, %v51, 0
  %v523 = vsel %vm407, %v52, 0
  %v526 = vsel %vm407, %v53, 0
  %v529 = vsel %vm407, %v54, 0
  %v532 = vsel %vm407, %v55, 0
  %v535 = vsel %vm407, %v56, 0
  %v538 = vsel %vm407, %v57, 0
  %v541 = vsel %vm407, %v58, 0
  %v544 = vsel %vm407, %v59, 0
  %v547 = vsel %vm407, %v60, 0
  %v550 = vsel %vm407, %v61, 0
  %v553 = vsel %vm407, %v62, 0
  %v556 = vsel %vm407, %v63, 0
  %v559 = vsel %vm407, %v64, 0
  %v562 = vsel %vm407, %v65, 0
  %v565 = vsel %vm407, %v66, 0
  %v568 = vsel %vm407, %v67, 0
  %v571 = vsel %vm407, %v68, 0
  %v574 = vsel %vm407, %v69, 0
  %v577 = vsel %vm407, %v70, 0
  %v580 = vsel %vm407, %v71, 0
  %v583 = vsel %vm407, %v72, 0
  %v586 = vsel %vm407, %v73, 0
  %v589 = vsel %vm407, %v74, 0
  %v592 = vsel %vm407, %v75, 0
  %v595 = vsel %vm407, %v76, 0
  %v598 = vsel %vm407, %v77, 0
  %v601 = vsel %vm407, %v78, 0
  %v604 = vsel %vm407, %v79, 0
  %v607 = vsel %vm407, %v80, 0
  %v610 = vsel %vm407, %v81, 0
  %v613 = vsel %vm407, %v82, 0
  %v616 = vsel %vm407, %v83, 0
  %v619 = vsel %vm407, %v84, 0
  %v622 = vsel %vm407, %v85, 0
  %v625 = vsel %vm407, %v86, 0
  %v628 = vsel %vm407, %v87, 0
  %v631 = vsel %vm407, %v88, 0
  %v634 = vsel %vm407, %v89, 0
  %v637 = vsel %vm407, %v90, 0
  %v640 = vsel %vm407, %v91, 0
  %v643 = vsel %vm407, %v92, 0
  %v646 = vsel %vm407, %v93, 0
  %v649 = vsel %vm407, %v94, 0
  %v652 = vsel %vm407, %v95, 0
  %v655 = vsel %vm407, %v96, 0
  %v658 = vsel %vm407, %v97, 0
  %v661 = vsel %vm407, %v98, 0
  %v664 = vsel %vm407, %v99, 0
  %v667 = vsel %vm407, %v100, 0
  %v670 = vsel %vm407, %v101, 0
  %v673 = vsel %vm407, %v102, 0
  %v676 = vsel %vm407, %v103, 0
  %v679 = vsel %vm407, %v104, 0
  %v682 = vsel %vm407, %v105, 0
  %v685 = vsel %vm407, %v106, 0
  %v688 = vsel %vm407, %v107, 0
  %v691 = vsel %vm407, %v108, 0
  %v694 = vsel %vm407, %v109, 0
  %v697 = vsel %vm407, %v110, 0
  %v700 = vsel %vm407, %v111, 0
  %v703 = vsel %vm407, %v112, 0
  %v706 = vsel %vm407, %v113, 0
  %v709 = vsel %vm407, %v114, 0
  %v712 = vsel %vm407, %v115, 0
  %v715 = vsel %vm407, %v116, 0
  %v718 = vsel %vm407, %v117, 0
  %v721 = vsel %vm407, %v118, 0
  %v724 = vsel %vm407, %v119, 0
  %v727 = vsel %vm407, %v120, 0
  %v730 = vsel %vm407, %v121, 0
  %v733 = vsel %vm407, %v122, 0
  %v736 = vsel %vm407, %v123, 0
  %v739 = vsel %vm407, %v124, 0
  %v742 = vsel %vm407, %v125, 0
  %v745 = vsel %vm407, %v126, 0
  %v748 = vsel %vm407, %v127, 0
  %v751 = vsel %vm407, %v128, 0
  %v754 = vsel %vm407, %v129, 0
  %v757 = vsel %vm407, %v130, 0
  %v760 = vsel %vm407, %v131, 0
  %v763 = vsel %vm407, %v132, 0
  %v766 = vsel %vm407, %v133, 0
  %v769 = vsel %vm407, %v134, 0
  %v772 = vsel %vm407, %v135, 0
  %v775 = vsel %vm407, %v136, 0
  %v778 = vsel %vm407, %v137, 0
  %v781 = vsel %vm407, %v138, 0
  %v784 = vsel %vm407, %v139, 0
  %v787 = vsel %vm407, %v140, 0
  %v790 = vsel %vm407, %v141, 0
  %792 = vmatprep.subr.mxu0 0.0
  %793 = vmatpush1.msra.mxu0 %v398
  %794 = vmatprep.subr.mxu0 0.0
  %795 = vmatpush1.msra.mxu0 %v399
  %796 = vmatprep.subr.mxu0 0.0
  %797 = vmatpush1.msra.mxu0 0.0
  %798 = vmatprep.subr.mxu0 0.0
  %799 = vmatpush1.msra.mxu0 0.0
  %800 = vmatprep.subr.mxu0 0.0
  %801 = vmatpush1.msra.mxu0 0.0
  %802 = vmatprep.subr.mxu0 0.0
  %803 = vmatpush1.msra.mxu0 0.0
  %804 = vmatprep.subr.mxu0 0.0
  %805 = vmatpush1.msra.mxu0 0.0
  %806 = vmatprep.subr.mxu0 0.0
  %807 = vmatpush1.msra.mxu0 0.0
  %808 = vmatprep.subr.mxu0 0.0
  %809 = vmatpush1.msra.mxu0 0.0
  %810 = vmatprep.subr.mxu0 0.0
  %811 = vmatpush1.msra.mxu0 0.0
  %812 = vmatprep.subr.mxu0 0.0
  %813 = vmatpush1.msra.mxu0 0.0
  %814 = vmatprep.subr.mxu0 0.0
  %815 = vmatpush1.msra.mxu0 0.0
  %816 = vmatprep.subr.mxu0 0.0
  %817 = vmatpush1.msra.mxu0 0.0
  %818 = vmatprep.subr.mxu0 0.0
  %819 = vmatpush1.msra.mxu0 0.0
  %820 = vmatprep.subr.mxu0 0.0
  %821 = vmatpush1.msra.mxu0 0.0
  %822 = vmatprep.subr.mxu0 0.0
  %823 = vmatpush1.msra.mxu0 0.0
  %824 = vmatprep.subr.mxu0 0.0
  %825 = vmatpush1.msra.mxu0 0.0
  %826 = vmatprep.subr.mxu0 0.0
  %827 = vmatpush1.msra.mxu0 0.0
  %828 = vmatprep.subr.mxu0 0.0
  %829 = vmatpush1.msra.mxu0 0.0
  %830 = vmatprep.subr.mxu0 0.0
  %831 = vmatpush1.msra.mxu0 0.0
  %832 = vmatprep.subr.mxu0 0.0
  %833 = vmatpush1.msra.mxu0 0.0
  %834 = vmatprep.subr.mxu0 0.0
  %835 = vmatpush1.msra.mxu0 0.0
  %836 = vmatprep.subr.mxu0 0.0
  %837 = vmatpush1.msra.mxu0 0.0
  %838 = vmatprep.subr.mxu0 0.0
  %839 = vmatpush1.msra.mxu0 0.0
  %840 = vmatprep.subr.mxu0 0.0
  %841 = vmatpush1.msra.mxu0 0.0
  %842 = vmatprep.subr.mxu0 0.0
  %843 = vmatpush1.msra.mxu0 0.0
  %844 = vmatprep.subr.mxu0 0.0
  %845 = vmatpush1.msra.mxu0 0.0
  %846 = vmatprep.subr.mxu0 0.0
  %847 = vmatpush1.msra.mxu0 0.0
  %848 = vmatprep.subr.mxu0 0.0
  %849 = vmatpush1.msra.mxu0 0.0
  %850 = vmatprep.subr.mxu0 0.0
  %851 = vmatpush1.msra.mxu0 0.0
  %852 = vmatprep.subr.mxu0 0.0
  %853 = vmatpush1.msra.mxu0 0.0
  %854 = vmatprep.subr.mxu0 0.0
  %855 = vmatpush1.msra.mxu0 0.0
  %856 = vmatprep.mubr.f32.mxu0 0.0
  %857 = vmatmul.mubr.f32.gmra.mrb[0].mxu0 %v409
  %v858 = vpop.f32.mrb[0].mxu0
  %v859 = vadd.f32 %v405, %v858
  %v860 = vpop.f32.mrb[0].mxu0
  %861 = vmatprep.mubr.f32.mxu0 0.0
  %862 = vmatmul.mubr.f32.gmra.mrb[0].mxu0 %v412
  %v863 = vpop.f32.mrb[0].mxu0
  %v864 = vadd.f32 %v405, %v863
  %v865 = vpop.f32.mrb[0].mxu0
  %866 = vmatprep.mubr.f32.mxu0 0.0
  %867 = vmatmul.mubr.f32.gmra.mrb[0].mxu0 %v415
  %v868 = vpop.f32.mrb[0].mxu0
  %v869 = vadd.f32 %v405, %v868
  %v870 = vpop.f32.mrb[0].mxu0
  %871 = vmatprep.mubr.f32.mxu0 0.0
  %872 = vmatmul.mubr.f32.gmra.mrb[0].mxu0 %v418
  %v873 = vpop.f32.mrb[0].mxu0
  %v874 = vadd.f32 %v405, %v873
  %v875 = vpop.f32.mrb[0].mxu0
  %876 = vmatprep.mubr.f32.mxu0 0.0
  %877 = vmatmul.mubr.f32.gmra.mrb[0].mxu0 %v421
  %v878 = vpop.f32.mrb[0].mxu0
  %v879 = vadd.f32 %v405, %v878
  %v880 = vpop.f32.mrb[0].mxu0
  %881 = vmatprep.mubr.f32.mxu0 0.0
  %882 = vmatmul.mubr.f32.gmra.mrb[0].mxu0 %v424
  %v883 = vpop.f32.mrb[0].mxu0
  %v884 = vadd.f32 %v405, %v883
  %v885 = vpop.f32.mrb[0].mxu0
  %886 = vmatprep.mubr.f32.mxu0 0.0
  %887 = vmatmul.mubr.f32.gmra.mrb[0].mxu0 %v427
  %v888 = vpop.f32.mrb[0].mxu0
  %v889 = vadd.f32 %v405, %v888
  %v890 = vpop.f32.mrb[0].mxu0
  %891 = vmatprep.mubr.f32.mxu0 0.0
  %892 = vmatmul.mubr.f32.gmra.mrb[0].mxu0 %v430
  %v893 = vpop.f32.mrb[0].mxu0
  %v894 = vadd.f32 %v405, %v893
  %v895 = vpop.f32.mrb[0].mxu0
  %896 = vmatprep.mubr.f32.mxu0 0.0
  %897 = vmatmul.mubr.f32.gmra.mrb[0].mxu0 %v433
  %v898 = vpop.f32.mrb[0].mxu0
  %v899 = vadd.f32 %v405, %v898
  %v900 = vpop.f32.mrb[0].mxu0
  %901 = vmatprep.mubr.f32.mxu0 0.0
  %902 = vmatmul.mubr.f32.gmra.mrb[0].mxu0 %v436
  %v903 = vpop.f32.mrb[0].mxu0
  %v904 = vadd.f32 %v405, %v903
  %v905 = vpop.f32.mrb[0].mxu0
  %906 = vmatprep.mubr.f32.mxu0 0.0
  %907 = vmatmul.mubr.f32.gmra.mrb[0].mxu0 %v439
  %v908 = vpop.f32.mrb[0].mxu0
  %v909 = vadd.f32 %v405, %v908
  %v910 = vpop.f32.mrb[0].mxu0
  %911 = vmatprep.mubr.f32.mxu0 0.0
  %912 = vmatmul.mubr.f32.gmra.mrb[0].mxu0 %v442
  %v913 = vpop.f32.mrb[0].mxu0
  %v914 = vadd.f32 %v405, %v913
  %v915 = vpop.f32.mrb[0].mxu0
  %916 = vmatprep.mubr.f32.mxu0 0.0
  %917 = vmatmul.mubr.f32.gmra.mrb[0].mxu0 %v445
  %v918 = vpop.f32.mrb[0].mxu0
  %v919 = vadd.f32 %v405, %v918
  %v920 = vpop.f32.mrb[0].mxu0
  %921 = vmatprep.mubr.f32.mxu0 0.0
  %922 = vmatmul.mubr.f32.gmra.mrb[0].mxu0 %v448
  %v923 = vpop.f32.mrb[0].mxu0
  %v924 = vadd.f32 %v405, %v923
  %v925 = vpop.f32.mrb[0].mxu0
  %926 = vmatprep.mubr.f32.mxu0 0.0
  %927 = vmatmul.mubr.f32.gmra.mrb[0].mxu0 %v451
  %v928 = vpop.f32.mrb[0].mxu0
  %v929 = vadd.f32 %v405, %v928
  %v930 = vpop.f32.mrb[0].mxu0
  %931 = vmatprep.mubr.f32.mxu0 0.0
  %932 = vmatmul.mubr.f32.gmra.mrb[0].mxu0 %v454
  %v933 = vpop.f32.mrb[0].mxu0
  %v934 = vadd.f32 %v405, %v933
  %v935 = vpop.f32.mrb[0].mxu0
  %936 = vmatprep.mubr.f32.mxu0 0.0
  %937 = vmatmul.mubr.f32.gmra.mrb[0].mxu0 %v457
  %v938 = vpop.f32.mrb[0].mxu0
  %v939 = vadd.f32 %v405, %v938
  %v940 = vpop.f32.mrb[0].mxu0
  %941 = vmatprep.mubr.f32.mxu0 0.0
  %942 = vmatmul.mubr.f32.gmra.mrb[0].mxu0 %v460
  %v943 = vpop.f32.mrb[0].mxu0
  %v944 = vadd.f32 %v405, %v943
  %v945 = vpop.f32.mrb[0].mxu0
  %946 = vmatprep.mubr.f32.mxu0 0.0
  %947 = vmatmul.mubr.f32.gmra.mrb[0].mxu0 %v463
  %v948 = vpop.f32.mrb[0].mxu0
  %v949 = vadd.f32 %v405, %v948
  %v950 = vpop.f32.mrb[0].mxu0
  %951 = vmatprep.mubr.f32.mxu0 0.0
  %952 = vmatmul.mubr.f32.gmra.mrb[0].mxu0 %v466
  %v953 = vpop.f32.mrb[0].mxu0
  %v954 = vadd.f32 %v405, %v953
  %v955 = vpop.f32.mrb[0].mxu0
  %956 = vmatprep.mubr.f32.mxu0 0.0
  %957 = vmatmul.mubr.f32.gmra.mrb[0].mxu0 %v469
  %v958 = vpop.f32.mrb[0].mxu0
  %v959 = vadd.f32 %v405, %v958
  %v960 = vpop.f32.mrb[0].mxu0
  %961 = vmatprep.mubr.f32.mxu0 0.0
  %962 = vmatmul.mubr.f32.gmra.mrb[0].mxu0 %v472
  %v963 = vpop.f32.mrb[0].mxu0
  %v964 = vadd.f32 %v405, %v963
  %v965 = vpop.f32.mrb[0].mxu0
  %966 = vmatprep.mubr.f32.mxu0 0.0
  %967 = vmatmul.mubr.f32.gmra.mrb[0].mxu0 %v475
  %v968 = vpop.f32.mrb[0].mxu0
  %v969 = vadd.f32 %v405, %v968
  %v970 = vpop.f32.mrb[0].mxu0
  %971 = vmatprep.mubr.f32.mxu0 0.0
  %972 = vmatmul.mubr.f32.gmra.mrb[0].mxu0 %v478
  %v973 = vpop.f32.mrb[0].mxu0
  %v974 = vadd.f32 %v405, %v973
  %v975 = vpop.f32.mrb[0].mxu0
  %976 = vmatprep.mubr.f32.mxu0 0.0
  %977 = vmatmul.mubr.f32.gmra.mrb[0].mxu0 %v481
  %v978 = vpop.f32.mrb[0].mxu0
  %v979 = vadd.f32 %v405, %v978
  %v980 = vpop.f32.mrb[0].mxu0
  %981 = vmatprep.mubr.f32.mxu0 0.0
  %982 = vmatmul.mubr.f32.gmra.mrb[0].mxu0 %v484
  %v983 = vpop.f32.mrb[0].mxu0
  %v984 = vadd.f32 %v405, %v983
  %v985 = vpop.f32.mrb[0].mxu0
  %986 = vmatprep.mubr.f32.mxu0 0.0
  %987 = vmatmul.mubr.f32.gmra.mrb[0].mxu0 %v487
  %v988 = vpop.f32.mrb[0].mxu0
  %v989 = vadd.f32 %v405, %v988
  %v990 = vpop.f32.mrb[0].mxu0
  %991 = vmatprep.mubr.f32.mxu0 0.0
  %992 = vmatmul.mubr.f32.gmra.mrb[0].mxu0 %v490
  %v993 = vpop.f32.mrb[0].mxu0
  %v994 = vadd.f32 %v405, %v993
  %v995 = vpop.f32.mrb[0].mxu0
  %996 = vmatprep.mubr.f32.mxu0 0.0
  %997 = vmatmul.mubr.f32.gmra.mrb[0].mxu0 %v493
  %v998 = vpop.f32.mrb[0].mxu0
  %v999 = vadd.f32 %v405, %v998
  %v1000 = vpop.f32.mrb[0].mxu0
  %1001 = vmatprep.mubr.f32.mxu0 0.0
  %1002 = vmatmul.mubr.f32.gmra.mrb[0].mxu0 %v496
  %v1003 = vpop.f32.mrb[0].mxu0
  %v1004 = vadd.f32 %v405, %v1003
  %v1005 = vpop.f32.mrb[0].mxu0
  %1006 = vmatprep.mubr.f32.mxu0 0.0
  %1007 = vmatmul.mubr.f32.gmra.mrb[0].mxu0 %v499
  %v1008 = vpop.f32.mrb[0].mxu0
  %v1009 = vadd.f32 %v405, %v1008
  %v1010 = vpop.f32.mrb[0].mxu0
  %1011 = vmatprep.mubr.f32.mxu0 0.0
  %1012 = vmatmul.mubr.f32.gmra.mrb[0].mxu0 %v502
  %v1013 = vpop.f32.mrb[0].mxu0
  %v1014 = vadd.f32 %v405, %v1013
  %v1015 = vpop.f32.mrb[0].mxu0
  %1016 = vmatprep.mubr.f32.mxu0 0.0
  %1017 = vmatmul.mubr.f32.gmra.mrb[0].mxu0 %v505
  %v1018 = vpop.f32.mrb[0].mxu0
  %v1019 = vadd.f32 %v405, %v1018
  %v1020 = vpop.f32.mrb[0].mxu0
  %1021 = vmatprep.mubr.f32.mxu0 0.0
  %1022 = vmatmul.mubr.f32.gmra.mrb[0].mxu0 %v508
  %v1023 = vpop.f32.mrb[0].mxu0
  %v1024 = vadd.f32 %v405, %v1023
  %v1025 = vpop.f32.mrb[0].mxu0
  %1026 = vmatprep.mubr.f32.mxu0 0.0
  %1027 = vmatmul.mubr.f32.gmra.mrb[0].mxu0 %v511
  %v1028 = vpop.f32.mrb[0].mxu0
  %v1029 = vadd.f32 %v405, %v1028
  %v1030 = vpop.f32.mrb[0].mxu0
  %1031 = vmatprep.mubr.f32.mxu0 0.0
  %1032 = vmatmul.mubr.f32.gmra.mrb[0].mxu0 %v514
  %v1033 = vpop.f32.mrb[0].mxu0
  %v1034 = vadd.f32 %v405, %v1033
  %v1035 = vpop.f32.mrb[0].mxu0
  %1036 = vmatprep.mubr.f32.mxu0 0.0
  %1037 = vmatmul.mubr.f32.gmra.mrb[0].mxu0 %v517
  %v1038 = vpop.f32.mrb[0].mxu0
  %v1039 = vadd.f32 %v405, %v1038
  %v1040 = vpop.f32.mrb[0].mxu0
  %1041 = vmatprep.mubr.f32.mxu0 0.0
  %1042 = vmatmul.mubr.f32.gmra.mrb[0].mxu0 %v520
  %v1043 = vpop.f32.mrb[0].mxu0
  %v1044 = vadd.f32 %v405, %v1043
  %v1045 = vpop.f32.mrb[0].mxu0
  %1046 = vmatprep.mubr.f32.mxu0 0.0
  %1047 = vmatmul.mubr.f32.gmra.mrb[0].mxu0 %v523
  %v1048 = vpop.f32.mrb[0].mxu0
  %v1049 = vadd.f32 %v405, %v1048
  %v1050 = vpop.f32.mrb[0].mxu0
  %1051 = vmatprep.mubr.f32.mxu0 0.0
  %1052 = vmatmul.mubr.f32.gmra.mrb[0].mxu0 %v526
  %v1053 = vpop.f32.mrb[0].mxu0
  %v1054 = vadd.f32 %v405, %v1053
  %v1055 = vpop.f32.mrb[0].mxu0
  %1056 = vmatprep.mubr.f32.mxu0 0.0
  %1057 = vmatmul.mubr.f32.gmra.mrb[0].mxu0 %v529
  %v1058 = vpop.f32.mrb[0].mxu0
  %v1059 = vadd.f32 %v405, %v1058
  %v1060 = vpop.f32.mrb[0].mxu0
  %1061 = vmatprep.mubr.f32.mxu0 0.0
  %1062 = vmatmul.mubr.f32.gmra.mrb[0].mxu0 %v532
  %v1063 = vpop.f32.mrb[0].mxu0
  %v1064 = vadd.f32 %v405, %v1063
  %v1065 = vpop.f32.mrb[0].mxu0
  %1066 = vmatprep.mubr.f32.mxu0 0.0
  %1067 = vmatmul.mubr.f32.gmra.mrb[0].mxu0 %v535
  %v1068 = vpop.f32.mrb[0].mxu0
  %v1069 = vadd.f32 %v405, %v1068
  %v1070 = vpop.f32.mrb[0].mxu0
  %1071 = vmatprep.mubr.f32.mxu0 0.0
  %1072 = vmatmul.mubr.f32.gmra.mrb[0].mxu0 %v538
  %v1073 = vpop.f32.mrb[0].mxu0
  %v1074 = vadd.f32 %v405, %v1073
  %v1075 = vpop.f32.mrb[0].mxu0
  %1076 = vmatprep.mubr.f32.mxu0 0.0
  %1077 = vmatmul.mubr.f32.gmra.mrb[0].mxu0 %v541
  %v1078 = vpop.f32.mrb[0].mxu0
  %v1079 = vadd.f32 %v405, %v1078
  %v1080 = vpop.f32.mrb[0].mxu0
  %1081 = vmatprep.mubr.f32.mxu0 0.0
  %1082 = vmatmul.mubr.f32.gmra.mrb[0].mxu0 %v544
  %v1083 = vpop.f32.mrb[0].mxu0
  %v1084 = vadd.f32 %v405, %v1083
  %v1085 = vpop.f32.mrb[0].mxu0
  %1086 = vmatprep.mubr.f32.mxu0 0.0
  %1087 = vmatmul.mubr.f32.gmra.mrb[0].mxu0 %v547
  %v1088 = vpop.f32.mrb[0].mxu0
  %v1089 = vadd.f32 %v405, %v1088
  %v1090 = vpop.f32.mrb[0].mxu0
  %1091 = vmatprep.mubr.f32.mxu0 0.0
  %1092 = vmatmul.mubr.f32.gmra.mrb[0].mxu0 %v550
  %v1093 = vpop.f32.mrb[0].mxu0
  %v1094 = vadd.f32 %v405, %v1093
  %v1095 = vpop.f32.mrb[0].mxu0
  %1096 = vmatprep.mubr.f32.mxu0 0.0
  %1097 = vmatmul.mubr.f32.gmra.mrb[0].mxu0 %v553
  %v1098 = vpop.f32.mrb[0].mxu0
  %v1099 = vadd.f32 %v405, %v1098
  %v1100 = vpop.f32.mrb[0].mxu0
  %1101 = vmatprep.mubr.f32.mxu0 0.0
  %1102 = vmatmul.mubr.f32.gmra.mrb[0].mxu0 %v556
  %v1103 = vpop.f32.mrb[0].mxu0
  %v1104 = vadd.f32 %v405, %v1103
  %v1105 = vpop.f32.mrb[0].mxu0
  %1106 = vmatprep.mubr.f32.mxu0 0.0
  %1107 = vmatmul.mubr.f32.gmra.mrb[0].mxu0 %v559
  %v1108 = vpop.f32.mrb[0].mxu0
  %v1109 = vadd.f32 %v405, %v1108
  %v1110 = vpop.f32.mrb[0].mxu0
  %1111 = vmatprep.mubr.f32.mxu0 0.0
  %1112 = vmatmul.mubr.f32.gmra.mrb[0].mxu0 %v562
  %v1113 = vpop.f32.mrb[0].mxu0
  %v1114 = vadd.f32 %v405, %v1113
  %v1115 = vpop.f32.mrb[0].mxu0
  %1116 = vmatprep.mubr.f32.mxu0 0.0
  %1117 = vmatmul.mubr.f32.gmra.mrb[0].mxu0 %v565
  %v1118 = vpop.f32.mrb[0].mxu0
  %v1119 = vadd.f32 %v405, %v1118
  %v1120 = vpop.f32.mrb[0].mxu0
  %1121 = vmatprep.mubr.f32.mxu0 0.0
  %1122 = vmatmul.mubr.f32.gmra.mrb[0].mxu0 %v568
  %v1123 = vpop.f32.mrb[0].mxu0
  %v1124 = vadd.f32 %v405, %v1123
  %v1125 = vpop.f32.mrb[0].mxu0
  %1126 = vmatprep.mubr.f32.mxu0 0.0
  %1127 = vmatmul.mubr.f32.gmra.mrb[0].mxu0 %v571
  %v1128 = vpop.f32.mrb[0].mxu0
  %v1129 = vadd.f32 %v405, %v1128
  %v1130 = vpop.f32.mrb[0].mxu0
  %1131 = vmatprep.mubr.f32.mxu0 0.0
  %1132 = vmatmul.mubr.f32.gmra.mrb[0].mxu0 %v574
  %v1133 = vpop.f32.mrb[0].mxu0
  %v1134 = vadd.f32 %v405, %v1133
  %v1135 = vpop.f32.mrb[0].mxu0
  %1136 = vmatprep.mubr.f32.mxu0 0.0
  %1137 = vmatmul.mubr.f32.gmra.mrb[0].mxu0 %v577
  %v1138 = vpop.f32.mrb[0].mxu0
  %v1139 = vadd.f32 %v405, %v1138
  %v1140 = vpop.f32.mrb[0].mxu0
  %1141 = vmatprep.mubr.f32.mxu0 0.0
  %1142 = vmatmul.mubr.f32.gmra.mrb[0].mxu0 %v580
  %v1143 = vpop.f32.mrb[0].mxu0
  %v1144 = vadd.f32 %v405, %v1143
  %v1145 = vpop.f32.mrb[0].mxu0
  %1146 = vmatprep.mubr.f32.mxu0 0.0
  %1147 = vmatmul.mubr.f32.gmra.mrb[0].mxu0 %v583
  %v1148 = vpop.f32.mrb[0].mxu0
  %v1149 = vadd.f32 %v405, %v1148
  %v1150 = vpop.f32.mrb[0].mxu0
  %1151 = vmatprep.mubr.f32.mxu0 0.0
  %1152 = vmatmul.mubr.f32.gmra.mrb[0].mxu0 %v586
  %v1153 = vpop.f32.mrb[0].mxu0
  %v1154 = vadd.f32 %v405, %v1153
  %v1155 = vpop.f32.mrb[0].mxu0
  %1156 = vmatprep.mubr.f32.mxu0 0.0
  %1157 = vmatmul.mubr.f32.gmra.mrb[0].mxu0 %v589
  %v1158 = vpop.f32.mrb[0].mxu0
  %v1159 = vadd.f32 %v405, %v1158
  %v1160 = vpop.f32.mrb[0].mxu0
  %1161 = vmatprep.mubr.f32.mxu0 0.0
  %1162 = vmatmul.mubr.f32.gmra.mrb[0].mxu0 %v592
  %v1163 = vpop.f32.mrb[0].mxu0
  %v1164 = vadd.f32 %v405, %v1163
  %v1165 = vpop.f32.mrb[0].mxu0
  %1166 = vmatprep.mubr.f32.mxu0 0.0
  %1167 = vmatmul.mubr.f32.gmra.mrb[0].mxu0 %v595
  %v1168 = vpop.f32.mrb[0].mxu0
  %v1169 = vadd.f32 %v405, %v1168
  %v1170 = vpop.f32.mrb[0].mxu0
  %1171 = vmatprep.mubr.f32.mxu0 0.0
  %1172 = vmatmul.mubr.f32.gmra.mrb[0].mxu0 %v598
  %v1173 = vpop.f32.mrb[0].mxu0
  %v1174 = vadd.f32 %v405, %v1173
  %v1175 = vpop.f32.mrb[0].mxu0
  %1176 = vmatprep.mubr.f32.mxu0 0.0
  %1177 = vmatmul.mubr.f32.gmra.mrb[0].mxu0 %v601
  %v1178 = vpop.f32.mrb[0].mxu0
  %v1179 = vadd.f32 %v405, %v1178
  %v1180 = vpop.f32.mrb[0].mxu0
  %1181 = vmatprep.mubr.f32.mxu0 0.0
  %1182 = vmatmul.mubr.f32.gmra.mrb[0].mxu0 %v604
  %v1183 = vpop.f32.mrb[0].mxu0
  %v1184 = vadd.f32 %v405, %v1183
  %v1185 = vpop.f32.mrb[0].mxu0
  %1186 = vmatprep.mubr.f32.mxu0 0.0
  %1187 = vmatmul.mubr.f32.gmra.mrb[0].mxu0 %v607
  %v1188 = vpop.f32.mrb[0].mxu0
  %v1189 = vadd.f32 %v405, %v1188
  %v1190 = vpop.f32.mrb[0].mxu0
  %1191 = vmatprep.mubr.f32.mxu0 0.0
  %1192 = vmatmul.mubr.f32.gmra.mrb[0].mxu0 %v610
  %v1193 = vpop.f32.mrb[0].mxu0
  %v1194 = vadd.f32 %v405, %v1193
  %v1195 = vpop.f32.mrb[0].mxu0
  %1196 = vmatprep.mubr.f32.mxu0 0.0
  %1197 = vmatmul.mubr.f32.gmra.mrb[0].mxu0 %v613
  %v1198 = vpop.f32.mrb[0].mxu0
  %v1199 = vadd.f32 %v405, %v1198
  %v1200 = vpop.f32.mrb[0].mxu0
  %1201 = vmatprep.mubr.f32.mxu0 0.0
  %1202 = vmatmul.mubr.f32.gmra.mrb[0].mxu0 %v616
  %v1203 = vpop.f32.mrb[0].mxu0
  %v1204 = vadd.f32 %v405, %v1203
  %v1205 = vpop.f32.mrb[0].mxu0
  %1206 = vmatprep.mubr.f32.mxu0 0.0
  %1207 = vmatmul.mubr.f32.gmra.mrb[0].mxu0 %v619
  %v1208 = vpop.f32.mrb[0].mxu0
  %v1209 = vadd.f32 %v405, %v1208
  %v1210 = vpop.f32.mrb[0].mxu0
  %1211 = vmatprep.mubr.f32.mxu0 0.0
  %1212 = vmatmul.mubr.f32.gmra.mrb[0].mxu0 %v622
  %v1213 = vpop.f32.mrb[0].mxu0
  %v1214 = vadd.f32 %v405, %v1213
  %v1215 = vpop.f32.mrb[0].mxu0
  %1216 = vmatprep.mubr.f32.mxu0 0.0
  %1217 = vmatmul.mubr.f32.gmra.mrb[0].mxu0 %v625
  %v1218 = vpop.f32.mrb[0].mxu0
  %v1219 = vadd.f32 %v405, %v1218
  %v1220 = vpop.f32.mrb[0].mxu0
  %1221 = vmatprep.mubr.f32.mxu0 0.0
  %1222 = vmatmul.mubr.f32.gmra.mrb[0].mxu0 %v628
  %v1223 = vpop.f32.mrb[0].mxu0
  %v1224 = vadd.f32 %v405, %v1223
  %v1225 = vpop.f32.mrb[0].mxu0
  %1226 = vmatprep.mubr.f32.mxu0 0.0
  %1227 = vmatmul.mubr.f32.gmra.mrb[0].mxu0 %v631
  %v1228 = vpop.f32.mrb[0].mxu0
  %v1229 = vadd.f32 %v405, %v1228
  %v1230 = vpop.f32.mrb[0].mxu0
  %1231 = vmatprep.mubr.f32.mxu0 0.0
  %1232 = vmatmul.mubr.f32.gmra.mrb[0].mxu0 %v634
  %v1233 = vpop.f32.mrb[0].mxu0
  %v1234 = vadd.f32 %v405, %v1233
  %v1235 = vpop.f32.mrb[0].mxu0
  %1236 = vmatprep.mubr.f32.mxu0 0.0
  %1237 = vmatmul.mubr.f32.gmra.mrb[0].mxu0 %v637
  %v1238 = vpop.f32.mrb[0].mxu0
  %v1239 = vadd.f32 %v405, %v1238
  %v1240 = vpop.f32.mrb[0].mxu0
  %1241 = vmatprep.mubr.f32.mxu0 0.0
  %1242 = vmatmul.mubr.f32.gmra.mrb[0].mxu0 %v640
  %v1243 = vpop.f32.mrb[0].mxu0
  %v1244 = vadd.f32 %v405, %v1243
  %v1245 = vpop.f32.mrb[0].mxu0
  %1246 = vmatprep.mubr.f32.mxu0 0.0
  %1247 = vmatmul.mubr.f32.gmra.mrb[0].mxu0 %v643
  %v1248 = vpop.f32.mrb[0].mxu0
  %v1249 = vadd.f32 %v405, %v1248
  %v1250 = vpop.f32.mrb[0].mxu0
  %1251 = vmatprep.mubr.f32.mxu0 0.0
  %1252 = vmatmul.mubr.f32.gmra.mrb[0].mxu0 %v646
  %v1253 = vpop.f32.mrb[0].mxu0
  %v1254 = vadd.f32 %v405, %v1253
  %v1255 = vpop.f32.mrb[0].mxu0
  %1256 = vmatprep.mubr.f32.mxu0 0.0
  %1257 = vmatmul.mubr.f32.gmra.mrb[0].mxu0 %v649
  %v1258 = vpop.f32.mrb[0].mxu0
  %v1259 = vadd.f32 %v405, %v1258
  %v1260 = vpop.f32.mrb[0].mxu0
  %1261 = vmatprep.mubr.f32.mxu0 0.0
  %1262 = vmatmul.mubr.f32.gmra.mrb[0].mxu0 %v652
  %v1263 = vpop.f32.mrb[0].mxu0
  %v1264 = vadd.f32 %v405, %v1263
  %v1265 = vpop.f32.mrb[0].mxu0
  %1266 = vmatprep.mubr.f32.mxu0 0.0
  %1267 = vmatmul.mubr.f32.gmra.mrb[0].mxu0 %v655
  %v1268 = vpop.f32.mrb[0].mxu0
  %v1269 = vadd.f32 %v405, %v1268
  %v1270 = vpop.f32.mrb[0].mxu0
  %1271 = vmatprep.mubr.f32.mxu0 0.0
  %1272 = vmatmul.mubr.f32.gmra.mrb[0].mxu0 %v658
  %v1273 = vpop.f32.mrb[0].mxu0
  %v1274 = vadd.f32 %v405, %v1273
  %v1275 = vpop.f32.mrb[0].mxu0
  %1276 = vmatprep.mubr.f32.mxu0 0.0
  %1277 = vmatmul.mubr.f32.gmra.mrb[0].mxu0 %v661
  %v1278 = vpop.f32.mrb[0].mxu0
  %v1279 = vadd.f32 %v405, %v1278
  %v1280 = vpop.f32.mrb[0].mxu0
  %1281 = vmatprep.mubr.f32.mxu0 0.0
  %1282 = vmatmul.mubr.f32.gmra.mrb[0].mxu0 %v664
  %v1283 = vpop.f32.mrb[0].mxu0
  %v1284 = vadd.f32 %v405, %v1283
  %v1285 = vpop.f32.mrb[0].mxu0
  %1286 = vmatprep.mubr.f32.mxu0 0.0
  %1287 = vmatmul.mubr.f32.gmra.mrb[0].mxu0 %v667
  %v1288 = vpop.f32.mrb[0].mxu0
  %v1289 = vadd.f32 %v405, %v1288
  %v1290 = vpop.f32.mrb[0].mxu0
  %1291 = vmatprep.mubr.f32.mxu0 0.0
  %1292 = vmatmul.mubr.f32.gmra.mrb[0].mxu0 %v670
  %v1293 = vpop.f32.mrb[0].mxu0
  %v1294 = vadd.f32 %v405, %v1293
  %v1295 = vpop.f32.mrb[0].mxu0
  %1296 = vmatprep.mubr.f32.mxu0 0.0
  %1297 = vmatmul.mubr.f32.gmra.mrb[0].mxu0 %v673
  %v1298 = vpop.f32.mrb[0].mxu0
  %v1299 = vadd.f32 %v405, %v1298
  %v1300 = vpop.f32.mrb[0].mxu0
  %1301 = vmatprep.mubr.f32.mxu0 0.0
  %1302 = vmatmul.mubr.f32.gmra.mrb[0].mxu0 %v676
  %v1303 = vpop.f32.mrb[0].mxu0
  %v1304 = vadd.f32 %v405, %v1303
  %v1305 = vpop.f32.mrb[0].mxu0
  %1306 = vmatprep.mubr.f32.mxu0 0.0
  %1307 = vmatmul.mubr.f32.gmra.mrb[0].mxu0 %v679
  %v1308 = vpop.f32.mrb[0].mxu0
  %v1309 = vadd.f32 %v405, %v1308
  %v1310 = vpop.f32.mrb[0].mxu0
  %1311 = vmatprep.mubr.f32.mxu0 0.0
  %1312 = vmatmul.mubr.f32.gmra.mrb[0].mxu0 %v682
  %v1313 = vpop.f32.mrb[0].mxu0
  %v1314 = vadd.f32 %v405, %v1313
  %v1315 = vpop.f32.mrb[0].mxu0
  %1316 = vmatprep.mubr.f32.mxu0 0.0
  %1317 = vmatmul.mubr.f32.gmra.mrb[0].mxu0 %v685
  %v1318 = vpop.f32.mrb[0].mxu0
  %v1319 = vadd.f32 %v405, %v1318
  %v1320 = vpop.f32.mrb[0].mxu0
  %1321 = vmatprep.mubr.f32.mxu0 0.0
  %1322 = vmatmul.mubr.f32.gmra.mrb[0].mxu0 %v688
  %v1323 = vpop.f32.mrb[0].mxu0
  %v1324 = vadd.f32 %v405, %v1323
  %v1325 = vpop.f32.mrb[0].mxu0
  %1326 = vmatprep.mubr.f32.mxu0 0.0
  %1327 = vmatmul.mubr.f32.gmra.mrb[0].mxu0 %v691
  %v1328 = vpop.f32.mrb[0].mxu0
  %v1329 = vadd.f32 %v405, %v1328
  %v1330 = vpop.f32.mrb[0].mxu0
  %1331 = vmatprep.mubr.f32.mxu0 0.0
  %1332 = vmatmul.mubr.f32.gmra.mrb[0].mxu0 %v694
  %v1333 = vpop.f32.mrb[0].mxu0
  %v1334 = vadd.f32 %v405, %v1333
  %v1335 = vpop.f32.mrb[0].mxu0
  %1336 = vmatprep.mubr.f32.mxu0 0.0
  %1337 = vmatmul.mubr.f32.gmra.mrb[0].mxu0 %v697
  %v1338 = vpop.f32.mrb[0].mxu0
  %v1339 = vadd.f32 %v405, %v1338
  %v1340 = vpop.f32.mrb[0].mxu0
  %1341 = vmatprep.mubr.f32.mxu0 0.0
  %1342 = vmatmul.mubr.f32.gmra.mrb[0].mxu0 %v700
  %v1343 = vpop.f32.mrb[0].mxu0
  %v1344 = vadd.f32 %v405, %v1343
  %v1345 = vpop.f32.mrb[0].mxu0
  %1346 = vmatprep.mubr.f32.mxu0 0.0
  %1347 = vmatmul.mubr.f32.gmra.mrb[0].mxu0 %v703
  %v1348 = vpop.f32.mrb[0].mxu0
  %v1349 = vadd.f32 %v405, %v1348
  %v1350 = vpop.f32.mrb[0].mxu0
  %1351 = vmatprep.mubr.f32.mxu0 0.0
  %1352 = vmatmul.mubr.f32.gmra.mrb[0].mxu0 %v706
  %v1353 = vpop.f32.mrb[0].mxu0
  %v1354 = vadd.f32 %v405, %v1353
  %v1355 = vpop.f32.mrb[0].mxu0
  %1356 = vmatprep.mubr.f32.mxu0 0.0
  %1357 = vmatmul.mubr.f32.gmra.mrb[0].mxu0 %v709
  %v1358 = vpop.f32.mrb[0].mxu0
  %v1359 = vadd.f32 %v405, %v1358
  %v1360 = vpop.f32.mrb[0].mxu0
  %1361 = vmatprep.mubr.f32.mxu0 0.0
  %1362 = vmatmul.mubr.f32.gmra.mrb[0].mxu0 %v712
  %v1363 = vpop.f32.mrb[0].mxu0
  %v1364 = vadd.f32 %v405, %v1363
  %v1365 = vpop.f32.mrb[0].mxu0
  %1366 = vmatprep.mubr.f32.mxu0 0.0
  %1367 = vmatmul.mubr.f32.gmra.mrb[0].mxu0 %v715
  %v1368 = vpop.f32.mrb[0].mxu0
  %v1369 = vadd.f32 %v405, %v1368
  %v1370 = vpop.f32.mrb[0].mxu0
  %1371 = vmatprep.mubr.f32.mxu0 0.0
  %1372 = vmatmul.mubr.f32.gmra.mrb[0].mxu0 %v718
  %v1373 = vpop.f32.mrb[0].mxu0
  %v1374 = vadd.f32 %v405, %v1373
  %v1375 = vpop.f32.mrb[0].mxu0
  %1376 = vmatprep.mubr.f32.mxu0 0.0
  %1377 = vmatmul.mubr.f32.gmra.mrb[0].mxu0 %v721
  %v1378 = vpop.f32.mrb[0].mxu0
  %v1379 = vadd.f32 %v405, %v1378
  %v1380 = vpop.f32.mrb[0].mxu0
  %1381 = vmatprep.mubr.f32.mxu0 0.0
  %1382 = vmatmul.mubr.f32.gmra.mrb[0].mxu0 %v724
  %v1383 = vpop.f32.mrb[0].mxu0
  %v1384 = vadd.f32 %v405, %v1383
  %v1385 = vpop.f32.mrb[0].mxu0
  %1386 = vmatprep.mubr.f32.mxu0 0.0
  %1387 = vmatmul.mubr.f32.gmra.mrb[0].mxu0 %v727
  %v1388 = vpop.f32.mrb[0].mxu0
  %v1389 = vadd.f32 %v405, %v1388
  %v1390 = vpop.f32.mrb[0].mxu0
  %1391 = vmatprep.mubr.f32.mxu0 0.0
  %1392 = vmatmul.mubr.f32.gmra.mrb[0].mxu0 %v730
  %v1393 = vpop.f32.mrb[0].mxu0
  %v1394 = vadd.f32 %v405, %v1393
  %v1395 = vpop.f32.mrb[0].mxu0
  %1396 = vmatprep.mubr.f32.mxu0 0.0
  %1397 = vmatmul.mubr.f32.gmra.mrb[0].mxu0 %v733
  %v1398 = vpop.f32.mrb[0].mxu0
  %v1399 = vadd.f32 %v405, %v1398
  %v1400 = vpop.f32.mrb[0].mxu0
  %1401 = vmatprep.mubr.f32.mxu0 0.0
  %1402 = vmatmul.mubr.f32.gmra.mrb[0].mxu0 %v736
  %v1403 = vpop.f32.mrb[0].mxu0
  %v1404 = vadd.f32 %v405, %v1403
  %v1405 = vpop.f32.mrb[0].mxu0
  %1406 = vmatprep.mubr.f32.mxu0 0.0
  %1407 = vmatmul.mubr.f32.gmra.mrb[0].mxu0 %v739
  %v1408 = vpop.f32.mrb[0].mxu0
  %v1409 = vadd.f32 %v405, %v1408
  %v1410 = vpop.f32.mrb[0].mxu0
  %1411 = vmatprep.mubr.f32.mxu0 0.0
  %1412 = vmatmul.mubr.f32.gmra.mrb[0].mxu0 %v742
  %v1413 = vpop.f32.mrb[0].mxu0
  %v1414 = vadd.f32 %v405, %v1413
  %v1415 = vpop.f32.mrb[0].mxu0
  %1416 = vmatprep.mubr.f32.mxu0 0.0
  %1417 = vmatmul.mubr.f32.gmra.mrb[0].mxu0 %v745
  %v1418 = vpop.f32.mrb[0].mxu0
  %v1419 = vadd.f32 %v405, %v1418
  %v1420 = vpop.f32.mrb[0].mxu0
  %1421 = vmatprep.mubr.f32.mxu0 0.0
  %1422 = vmatmul.mubr.f32.gmra.mrb[0].mxu0 %v748
  %v1423 = vpop.f32.mrb[0].mxu0
  %v1424 = vadd.f32 %v405, %v1423
  %v1425 = vpop.f32.mrb[0].mxu0
  %1426 = vmatprep.mubr.f32.mxu0 0.0
  %1427 = vmatmul.mubr.f32.gmra.mrb[0].mxu0 %v751
  %v1428 = vpop.f32.mrb[0].mxu0
  %v1429 = vadd.f32 %v405, %v1428
  %v1430 = vpop.f32.mrb[0].mxu0
  %1431 = vmatprep.mubr.f32.mxu0 0.0
  %1432 = vmatmul.mubr.f32.gmra.mrb[0].mxu0 %v754
  %v1433 = vpop.f32.mrb[0].mxu0
  %v1434 = vadd.f32 %v405, %v1433
  %v1435 = vpop.f32.mrb[0].mxu0
  %1436 = vmatprep.mubr.f32.mxu0 0.0
  %1437 = vmatmul.mubr.f32.gmra.mrb[0].mxu0 %v757
  %v1438 = vpop.f32.mrb[0].mxu0
  %v1439 = vadd.f32 %v405, %v1438
  %v1440 = vpop.f32.mrb[0].mxu0
  %1441 = vmatprep.mubr.f32.mxu0 0.0
  %1442 = vmatmul.mubr.f32.gmra.mrb[0].mxu0 %v760
  %v1443 = vpop.f32.mrb[0].mxu0
  %v1444 = vadd.f32 %v405, %v1443
  %v1445 = vpop.f32.mrb[0].mxu0
  %1446 = vmatprep.mubr.f32.mxu0 0.0
  %1447 = vmatmul.mubr.f32.gmra.mrb[0].mxu0 %v763
  %v1448 = vpop.f32.mrb[0].mxu0
  %v1449 = vadd.f32 %v405, %v1448
  %v1450 = vpop.f32.mrb[0].mxu0
  %1451 = vmatprep.mubr.f32.mxu0 0.0
  %1452 = vmatmul.mubr.f32.gmra.mrb[0].mxu0 %v766
  %v1453 = vpop.f32.mrb[0].mxu0
  %v1454 = vadd.f32 %v405, %v1453
  %v1455 = vpop.f32.mrb[0].mxu0
  %1456 = vmatprep.mubr.f32.mxu0 0.0
  %1457 = vmatmul.mubr.f32.gmra.mrb[0].mxu0 %v769
  %v1458 = vpop.f32.mrb[0].mxu0
  %v1459 = vadd.f32 %v405, %v1458
  %v1460 = vpop.f32.mrb[0].mxu0
  %1461 = vmatprep.mubr.f32.mxu0 0.0
  %1462 = vmatmul.mubr.f32.gmra.mrb[0].mxu0 %v772
  %v1463 = vpop.f32.mrb[0].mxu0
  %v1464 = vadd.f32 %v405, %v1463
  %v1465 = vpop.f32.mrb[0].mxu0
  %1466 = vmatprep.mubr.f32.mxu0 0.0
  %1467 = vmatmul.mubr.f32.gmra.mrb[0].mxu0 %v775
  %v1468 = vpop.f32.mrb[0].mxu0
  %v1469 = vadd.f32 %v405, %v1468
  %v1470 = vpop.f32.mrb[0].mxu0
  %1471 = vmatprep.mubr.f32.mxu0 0.0
  %1472 = vmatmul.mubr.f32.gmra.mrb[0].mxu0 %v778
  %v1473 = vpop.f32.mrb[0].mxu0
  %v1474 = vadd.f32 %v405, %v1473
  %v1475 = vpop.f32.mrb[0].mxu0
  %1476 = vmatprep.mubr.f32.mxu0 0.0
  %1477 = vmatmul.mubr.f32.gmra.mrb[0].mxu0 %v781
  %v1478 = vpop.f32.mrb[0].mxu0
  %v1479 = vadd.f32 %v405, %v1478
  %v1480 = vpop.f32.mrb[0].mxu0
  %1481 = vmatprep.mubr.f32.mxu0 0.0
  %1482 = vmatmul.mubr.f32.gmra.mrb[0].mxu0 %v784
  %v1483 = vpop.f32.mrb[0].mxu0
  %v1484 = vadd.f32 %v405, %v1483
  %v1485 = vpop.f32.mrb[0].mxu0
  %1486 = vmatprep.mubr.f32.mxu0 0.0
  %1487 = vmatmul.mubr.f32.gmra.mrb[0].mxu0 %v787
  %v1488 = vpop.f32.mrb[0].mxu0
  %v1489 = vadd.f32 %v405, %v1488
  %v1490 = vpop.f32.mrb[0].mxu0
  %1491 = vmatprep.mubr.f32.mxu0 0.0
  %1492 = vmatmul.mubr.f32.gmra.mrb[0].mxu0 %v790
  %v1493 = vpop.f32.mrb[0].mxu0
  %v1494 = vadd.f32 %v405, %v1493
  %v1495 = vpop.f32.mrb[0].mxu0
  %1496 = vdwg.mxu0
  %v1497 = vmax.f32 %v859, 0.001
  %v1498 = vmax.f32 %v864, 0.001
  %v1499 = vmax.f32 %v869, 0.001
  %v1500 = vmax.f32 %v874, 0.001
  %v1501 = vmax.f32 %v879, 0.001
  %v1502 = vmax.f32 %v884, 0.001
  %v1503 = vmax.f32 %v889, 0.001
  %v1504 = vmax.f32 %v894, 0.001
  %v1505 = vmax.f32 %v899, 0.001
  %v1506 = vmax.f32 %v904, 0.001
  %v1507 = vmax.f32 %v909, 0.001
  %v1508 = vmax.f32 %v914, 0.001
  %v1509 = vmax.f32 %v919, 0.001
  %v1510 = vmax.f32 %v924, 0.001
  %v1511 = vmax.f32 %v929, 0.001
  %v1512 = vmax.f32 %v934, 0.001
  %v1513 = vmax.f32 %v939, 0.001
  %v1514 = vmax.f32 %v944, 0.001
  %v1515 = vmax.f32 %v949, 0.001
  %v1516 = vmax.f32 %v954, 0.001
  %v1517 = vmax.f32 %v959, 0.001
  %v1518 = vmax.f32 %v964, 0.001
  %v1519 = vmax.f32 %v969, 0.001
  %v1520 = vmax.f32 %v974, 0.001
  %v1521 = vmax.f32 %v979, 0.001
  %v1522 = vmax.f32 %v984, 0.001
  %v1523 = vmax.f32 %v989, 0.001
  %v1524 = vmax.f32 %v994, 0.001
  %v1525 = vmax.f32 %v999, 0.001
  %v1526 = vmax.f32 %v1004, 0.001
  %v1527 = vmax.f32 %v1009, 0.001
  %v1528 = vmax.f32 %v1014, 0.001
  %v1529 = vmax.f32 %v1019, 0.001
  %v1530 = vmax.f32 %v1024, 0.001
  %v1531 = vmax.f32 %v1029, 0.001
  %v1532 = vmax.f32 %v1034, 0.001
  %v1533 = vmax.f32 %v1039, 0.001
  %v1534 = vmax.f32 %v1044, 0.001
  %v1535 = vmax.f32 %v1049, 0.001
  %v1536 = vmax.f32 %v1054, 0.001
  %v1537 = vmax.f32 %v1059, 0.001
  %v1538 = vmax.f32 %v1064, 0.001
  %v1539 = vmax.f32 %v1069, 0.001
  %v1540 = vmax.f32 %v1074, 0.001
  %v1541 = vmax.f32 %v1079, 0.001
  %v1542 = vmax.f32 %v1084, 0.001
  %v1543 = vmax.f32 %v1089, 0.001
  %v1544 = vmax.f32 %v1094, 0.001
  %v1545 = vmax.f32 %v1099, 0.001
  %v1546 = vmax.f32 %v1104, 0.001
  %v1547 = vmax.f32 %v1109, 0.001
  %v1548 = vmax.f32 %v1114, 0.001
  %v1549 = vmax.f32 %v1119, 0.001
  %v1550 = vmax.f32 %v1124, 0.001
  %v1551 = vmax.f32 %v1129, 0.001
  %v1552 = vmax.f32 %v1134, 0.001
  %v1553 = vmax.f32 %v1139, 0.001
  %v1554 = vmax.f32 %v1144, 0.001
  %v1555 = vmax.f32 %v1149, 0.001
  %v1556 = vmax.f32 %v1154, 0.001
  %v1557 = vmax.f32 %v1159, 0.001
  %v1558 = vmax.f32 %v1164, 0.001
  %v1559 = vmax.f32 %v1169, 0.001
  %v1560 = vmax.f32 %v1174, 0.001
  %v1561 = vmax.f32 %v1179, 0.001
  %v1562 = vmax.f32 %v1184, 0.001
  %v1563 = vmax.f32 %v1189, 0.001
  %v1564 = vmax.f32 %v1194, 0.001
  %v1565 = vmax.f32 %v1199, 0.001
  %v1566 = vmax.f32 %v1204, 0.001
  %v1567 = vmax.f32 %v1209, 0.001
  %v1568 = vmax.f32 %v1214, 0.001
  %v1569 = vmax.f32 %v1219, 0.001
  %v1570 = vmax.f32 %v1224, 0.001
  %v1571 = vmax.f32 %v1229, 0.001
  %v1572 = vmax.f32 %v1234, 0.001
  %v1573 = vmax.f32 %v1239, 0.001
  %v1574 = vmax.f32 %v1244, 0.001
  %v1575 = vmax.f32 %v1249, 0.001
  %v1576 = vmax.f32 %v1254, 0.001
  %v1577 = vmax.f32 %v1259, 0.001
  %v1578 = vmax.f32 %v1264, 0.001
  %v1579 = vmax.f32 %v1269, 0.001
  %v1580 = vmax.f32 %v1274, 0.001
  %v1581 = vmax.f32 %v1279, 0.001
  %v1582 = vmax.f32 %v1284, 0.001
  %v1583 = vmax.f32 %v1289, 0.001
  %v1584 = vmax.f32 %v1294, 0.001
  %v1585 = vmax.f32 %v1299, 0.001
  %v1586 = vmax.f32 %v1304, 0.001
  %v1587 = vmax.f32 %v1309, 0.001
  %v1588 = vmax.f32 %v1314, 0.001
  %v1589 = vmax.f32 %v1319, 0.001
  %v1590 = vmax.f32 %v1324, 0.001
  %v1591 = vmax.f32 %v1329, 0.001
  %v1592 = vmax.f32 %v1334, 0.001
  %v1593 = vmax.f32 %v1339, 0.001
  %v1594 = vmax.f32 %v1344, 0.001
  %v1595 = vmax.f32 %v1349, 0.001
  %v1596 = vmax.f32 %v1354, 0.001
  %v1597 = vmax.f32 %v1359, 0.001
  %v1598 = vmax.f32 %v1364, 0.001
  %v1599 = vmax.f32 %v1369, 0.001
  %v1600 = vmax.f32 %v1374, 0.001
  %v1601 = vmax.f32 %v1379, 0.001
  %v1602 = vmax.f32 %v1384, 0.001
  %v1603 = vmax.f32 %v1389, 0.001
  %v1604 = vmax.f32 %v1394, 0.001
  %v1605 = vmax.f32 %v1399, 0.001
  %v1606 = vmax.f32 %v1404, 0.001
  %v1607 = vmax.f32 %v1409, 0.001
  %v1608 = vmax.f32 %v1414, 0.001
  %v1609 = vmax.f32 %v1419, 0.001
  %v1610 = vmax.f32 %v1424, 0.001
  %v1611 = vmax.f32 %v1429, 0.001
  %v1612 = vmax.f32 %v1434, 0.001
  %v1613 = vmax.f32 %v1439, 0.001
  %v1614 = vmax.f32 %v1444, 0.001
  %v1615 = vmax.f32 %v1449, 0.001
  %v1616 = vmax.f32 %v1454, 0.001
  %v1617 = vmax.f32 %v1459, 0.001
  %v1618 = vmax.f32 %v1464, 0.001
  %v1619 = vmax.f32 %v1469, 0.001
  %v1620 = vmax.f32 %v1474, 0.001
  %v1621 = vmax.f32 %v1479, 0.001
  %v1622 = vmax.f32 %v1484, 0.001
  %v1623 = vmax.f32 %v1489, 0.001
  %v1624 = vmax.f32 %v1494, 0.001
  %v1625 = vmin.f32 %v1497, 0.999
  %v1626 = vmin.f32 %v1498, 0.999
  %v1627 = vmin.f32 %v1499, 0.999
  %v1628 = vmin.f32 %v1500, 0.999
  %v1629 = vmin.f32 %v1501, 0.999
  %v1630 = vmin.f32 %v1502, 0.999
  %v1631 = vmin.f32 %v1503, 0.999
  %v1632 = vmin.f32 %v1504, 0.999
  %v1633 = vmin.f32 %v1505, 0.999
  %v1634 = vmin.f32 %v1506, 0.999
  %v1635 = vmin.f32 %v1507, 0.999
  %v1636 = vmin.f32 %v1508, 0.999
  %v1637 = vmin.f32 %v1509, 0.999
  %v1638 = vmin.f32 %v1510, 0.999
  %v1639 = vmin.f32 %v1511, 0.999
  %v1640 = vmin.f32 %v1512, 0.999
  %v1641 = vmin.f32 %v1513, 0.999
  %v1642 = vmin.f32 %v1514, 0.999
  %v1643 = vmin.f32 %v1515, 0.999
  %v1644 = vmin.f32 %v1516, 0.999
  %v1645 = vmin.f32 %v1517, 0.999
  %v1646 = vmin.f32 %v1518, 0.999
  %v1647 = vmin.f32 %v1519, 0.999
  %v1648 = vmin.f32 %v1520, 0.999
  %v1649 = vmin.f32 %v1521, 0.999
  %v1650 = vmin.f32 %v1522, 0.999
  %v1651 = vmin.f32 %v1523, 0.999
  %v1652 = vmin.f32 %v1524, 0.999
  %v1653 = vmin.f32 %v1525, 0.999
  %v1654 = vmin.f32 %v1526, 0.999
  %v1655 = vmin.f32 %v1527, 0.999
  %v1656 = vmin.f32 %v1528, 0.999
  %v1657 = vmin.f32 %v1529, 0.999
  %v1658 = vmin.f32 %v1530, 0.999
  %v1659 = vmin.f32 %v1531, 0.999
  %v1660 = vmin.f32 %v1532, 0.999
  %v1661 = vmin.f32 %v1533, 0.999
  %v1662 = vmin.f32 %v1534, 0.999
  %v1663 = vmin.f32 %v1535, 0.999
  %v1664 = vmin.f32 %v1536, 0.999
  %v1665 = vmin.f32 %v1537, 0.999
  %v1666 = vmin.f32 %v1538, 0.999
  %v1667 = vmin.f32 %v1539, 0.999
  %v1668 = vmin.f32 %v1540, 0.999
  %v1669 = vmin.f32 %v1541, 0.999
  %v1670 = vmin.f32 %v1542, 0.999
  %v1671 = vmin.f32 %v1543, 0.999
  %v1672 = vmin.f32 %v1544, 0.999
  %v1673 = vmin.f32 %v1545, 0.999
  %v1674 = vmin.f32 %v1546, 0.999
  %v1675 = vmin.f32 %v1547, 0.999
  %v1676 = vmin.f32 %v1548, 0.999
  %v1677 = vmin.f32 %v1549, 0.999
  %v1678 = vmin.f32 %v1550, 0.999
  %v1679 = vmin.f32 %v1551, 0.999
  %v1680 = vmin.f32 %v1552, 0.999
  %v1681 = vmin.f32 %v1553, 0.999
  %v1682 = vmin.f32 %v1554, 0.999
  %v1683 = vmin.f32 %v1555, 0.999
  %v1684 = vmin.f32 %v1556, 0.999
  %v1685 = vmin.f32 %v1557, 0.999
  %v1686 = vmin.f32 %v1558, 0.999
  %v1687 = vmin.f32 %v1559, 0.999
  %v1688 = vmin.f32 %v1560, 0.999
  %v1689 = vmin.f32 %v1561, 0.999
  %v1690 = vmin.f32 %v1562, 0.999
  %v1691 = vmin.f32 %v1563, 0.999
  %v1692 = vmin.f32 %v1564, 0.999
  %v1693 = vmin.f32 %v1565, 0.999
  %v1694 = vmin.f32 %v1566, 0.999
  %v1695 = vmin.f32 %v1567, 0.999
  %v1696 = vmin.f32 %v1568, 0.999
  %v1697 = vmin.f32 %v1569, 0.999
  %v1698 = vmin.f32 %v1570, 0.999
  %v1699 = vmin.f32 %v1571, 0.999
  %v1700 = vmin.f32 %v1572, 0.999
  %v1701 = vmin.f32 %v1573, 0.999
  %v1702 = vmin.f32 %v1574, 0.999
  %v1703 = vmin.f32 %v1575, 0.999
  %v1704 = vmin.f32 %v1576, 0.999
  %v1705 = vmin.f32 %v1577, 0.999
  %v1706 = vmin.f32 %v1578, 0.999
  %v1707 = vmin.f32 %v1579, 0.999
  %v1708 = vmin.f32 %v1580, 0.999
  %v1709 = vmin.f32 %v1581, 0.999
  %v1710 = vmin.f32 %v1582, 0.999
  %v1711 = vmin.f32 %v1583, 0.999
  %v1712 = vmin.f32 %v1584, 0.999
  %v1713 = vmin.f32 %v1585, 0.999
  %v1714 = vmin.f32 %v1586, 0.999
  %v1715 = vmin.f32 %v1587, 0.999
  %v1716 = vmin.f32 %v1588, 0.999
  %v1717 = vmin.f32 %v1589, 0.999
  %v1718 = vmin.f32 %v1590, 0.999
  %v1719 = vmin.f32 %v1591, 0.999
  %v1720 = vmin.f32 %v1592, 0.999
  %v1721 = vmin.f32 %v1593, 0.999
  %v1722 = vmin.f32 %v1594, 0.999
  %v1723 = vmin.f32 %v1595, 0.999
  %v1724 = vmin.f32 %v1596, 0.999
  %v1725 = vmin.f32 %v1597, 0.999
  %v1726 = vmin.f32 %v1598, 0.999
  %v1727 = vmin.f32 %v1599, 0.999
  %v1728 = vmin.f32 %v1600, 0.999
  %v1729 = vmin.f32 %v1601, 0.999
  %v1730 = vmin.f32 %v1602, 0.999
  %v1731 = vmin.f32 %v1603, 0.999
  %v1732 = vmin.f32 %v1604, 0.999
  %v1733 = vmin.f32 %v1605, 0.999
  %v1734 = vmin.f32 %v1606, 0.999
  %v1735 = vmin.f32 %v1607, 0.999
  %v1736 = vmin.f32 %v1608, 0.999
  %v1737 = vmin.f32 %v1609, 0.999
  %v1738 = vmin.f32 %v1610, 0.999
  %v1739 = vmin.f32 %v1611, 0.999
  %v1740 = vmin.f32 %v1612, 0.999
  %v1741 = vmin.f32 %v1613, 0.999
  %v1742 = vmin.f32 %v1614, 0.999
  %v1743 = vmin.f32 %v1615, 0.999
  %v1744 = vmin.f32 %v1616, 0.999
  %v1745 = vmin.f32 %v1617, 0.999
  %v1746 = vmin.f32 %v1618, 0.999
  %v1747 = vmin.f32 %v1619, 0.999
  %v1748 = vmin.f32 %v1620, 0.999
  %v1749 = vmin.f32 %v1621, 0.999
  %v1750 = vmin.f32 %v1622, 0.999
  %v1751 = vmin.f32 %v1623, 0.999
  %v1752 = vmin.f32 %v1624, 0.999
  %v1753 = vlaneseq
  %v1754 = vand.u32 %v1753, 127
  %vm1755 = vcmp.lt.s32.totalorder %v1754, 1
  %v1756 = vsel %vm1755, 1, 0
  %vm1757 = vcmp.eq.s32.totalorder %v1756, 1
  %v1758 = vsel %vm1757, 1.0, %v1625
  %v1759 = vsel %vm1757, 1.0, %v1626
  %v1760 = vsel %vm1757, 1.0, %v1627
  %v1761 = vsel %vm1757, 1.0, %v1628
  %v1762 = vsel %vm1757, 1.0, %v1629
  %v1763 = vsel %vm1757, 1.0, %v1630
  %v1764 = vsel %vm1757, 1.0, %v1631
  %v1765 = vsel %vm1757, 1.0, %v1632
  %v1766 = vsel %vm1757, 1.0, %v1633
  %v1767 = vsel %vm1757, 1.0, %v1634
  %v1768 = vsel %vm1757, 1.0, %v1635
  %v1769 = vsel %vm1757, 1.0, %v1636
  %v1770 = vsel %vm1757, 1.0, %v1637
  %v1771 = vsel %vm1757, 1.0, %v1638
  %v1772 = vsel %vm1757, 1.0, %v1639
  %v1773 = vsel %vm1757, 1.0, %v1640
  %v1774 = vsel %vm1757, 1.0, %v1641
  %v1775 = vsel %vm1757, 1.0, %v1642
  %v1776 = vsel %vm1757, 1.0, %v1643
  %v1777 = vsel %vm1757, 1.0, %v1644
  %v1778 = vsel %vm1757, 1.0, %v1645
  %v1779 = vsel %vm1757, 1.0, %v1646
  %v1780 = vsel %vm1757, 1.0, %v1647
  %v1781 = vsel %vm1757, 1.0, %v1648
  %v1782 = vsel %vm1757, 1.0, %v1649
  %v1783 = vsel %vm1757, 1.0, %v1650
  %v1784 = vsel %vm1757, 1.0, %v1651
  %v1785 = vsel %vm1757, 1.0, %v1652
  %v1786 = vsel %vm1757, 1.0, %v1653
  %v1787 = vsel %vm1757, 1.0, %v1654
  %v1788 = vsel %vm1757, 1.0, %v1655
  %v1789 = vsel %vm1757, 1.0, %v1656
  %v1790 = vsel %vm1757, 1.0, %v1657
  %v1791 = vsel %vm1757, 1.0, %v1658
  %v1792 = vsel %vm1757, 1.0, %v1659
  %v1793 = vsel %vm1757, 1.0, %v1660
  %v1794 = vsel %vm1757, 1.0, %v1661
  %v1795 = vsel %vm1757, 1.0, %v1662
  %v1796 = vsel %vm1757, 1.0, %v1663
  %v1797 = vsel %vm1757, 1.0, %v1664
  %v1798 = vsel %vm1757, 1.0, %v1665
  %v1799 = vsel %vm1757, 1.0, %v1666
  %v1800 = vsel %vm1757, 1.0, %v1667
  %v1801 = vsel %vm1757, 1.0, %v1668
  %v1802 = vsel %vm1757, 1.0, %v1669
  %v1803 = vsel %vm1757, 1.0, %v1670
  %v1804 = vsel %vm1757, 1.0, %v1671
  %v1805 = vsel %vm1757, 1.0, %v1672
  %v1806 = vsel %vm1757, 1.0, %v1673
  %v1807 = vsel %vm1757, 1.0, %v1674
  %v1808 = vsel %vm1757, 1.0, %v1675
  %v1809 = vsel %vm1757, 1.0, %v1676
  %v1810 = vsel %vm1757, 1.0, %v1677
  %v1811 = vsel %vm1757, 1.0, %v1678
  %v1812 = vsel %vm1757, 1.0, %v1679
  %v1813 = vsel %vm1757, 1.0, %v1680
  %v1814 = vsel %vm1757, 1.0, %v1681
  %v1815 = vsel %vm1757, 1.0, %v1682
  %v1816 = vsel %vm1757, 1.0, %v1683
  %v1817 = vsel %vm1757, 1.0, %v1684
  %v1818 = vsel %vm1757, 1.0, %v1685
  %v1819 = vsel %vm1757, 1.0, %v1686
  %v1820 = vsel %vm1757, 1.0, %v1687
  %v1821 = vsel %vm1757, 1.0, %v1688
  %v1822 = vsel %vm1757, 1.0, %v1689
  %v1823 = vsel %vm1757, 1.0, %v1690
  %v1824 = vsel %vm1757, 1.0, %v1691
  %v1825 = vsel %vm1757, 1.0, %v1692
  %v1826 = vsel %vm1757, 1.0, %v1693
  %v1827 = vsel %vm1757, 1.0, %v1694
  %v1828 = vsel %vm1757, 1.0, %v1695
  %v1829 = vsel %vm1757, 1.0, %v1696
  %v1830 = vsel %vm1757, 1.0, %v1697
  %v1831 = vsel %vm1757, 1.0, %v1698
  %v1832 = vsel %vm1757, 1.0, %v1699
  %v1833 = vsel %vm1757, 1.0, %v1700
  %v1834 = vsel %vm1757, 1.0, %v1701
  %v1835 = vsel %vm1757, 1.0, %v1702
  %v1836 = vsel %vm1757, 1.0, %v1703
  %v1837 = vsel %vm1757, 1.0, %v1704
  %v1838 = vsel %vm1757, 1.0, %v1705
  %v1839 = vsel %vm1757, 1.0, %v1706
  %v1840 = vsel %vm1757, 1.0, %v1707
  %v1841 = vsel %vm1757, 1.0, %v1708
  %v1842 = vsel %vm1757, 1.0, %v1709
  %v1843 = vsel %vm1757, 1.0, %v1710
  %v1844 = vsel %vm1757, 1.0, %v1711
  %v1845 = vsel %vm1757, 1.0, %v1712
  %v1846 = vsel %vm1757, 1.0, %v1713
  %v1847 = vsel %vm1757, 1.0, %v1714
  %v1848 = vsel %vm1757, 1.0, %v1715
  %v1849 = vsel %vm1757, 1.0, %v1716
  %v1850 = vsel %vm1757, 1.0, %v1717
  %v1851 = vsel %vm1757, 1.0, %v1718
  %v1852 = vsel %vm1757, 1.0, %v1719
  %v1853 = vsel %vm1757, 1.0, %v1720
  %v1854 = vsel %vm1757, 1.0, %v1721
  %v1855 = vsel %vm1757, 1.0, %v1722
  %v1856 = vsel %vm1757, 1.0, %v1723
  %v1857 = vsel %vm1757, 1.0, %v1724
  %v1858 = vsel %vm1757, 1.0, %v1725
  %v1859 = vsel %vm1757, 1.0, %v1726
  %v1860 = vsel %vm1757, 1.0, %v1727
  %v1861 = vsel %vm1757, 1.0, %v1728
  %v1862 = vsel %vm1757, 1.0, %v1729
  %v1863 = vsel %vm1757, 1.0, %v1730
  %v1864 = vsel %vm1757, 1.0, %v1731
  %v1865 = vsel %vm1757, 1.0, %v1732
  %v1866 = vsel %vm1757, 1.0, %v1733
  %v1867 = vsel %vm1757, 1.0, %v1734
  %v1868 = vsel %vm1757, 1.0, %v1735
  %v1869 = vsel %vm1757, 1.0, %v1736
  %v1870 = vsel %vm1757, 1.0, %v1737
  %v1871 = vsel %vm1757, 1.0, %v1738
  %v1872 = vsel %vm1757, 1.0, %v1739
  %v1873 = vsel %vm1757, 1.0, %v1740
  %v1874 = vsel %vm1757, 1.0, %v1741
  %v1875 = vsel %vm1757, 1.0, %v1742
  %v1876 = vsel %vm1757, 1.0, %v1743
  %v1877 = vsel %vm1757, 1.0, %v1744
  %v1878 = vsel %vm1757, 1.0, %v1745
  %v1879 = vsel %vm1757, 1.0, %v1746
  %v1880 = vsel %vm1757, 1.0, %v1747
  %v1881 = vsel %vm1757, 1.0, %v1748
  %v1882 = vsel %vm1757, 1.0, %v1749
  %v1883 = vsel %vm1757, 1.0, %v1750
  %v1884 = vsel %vm1757, 1.0, %v1751
  %v1885 = vsel %vm1757, 1.0, %v1752
  %1887 = vset.pattern.permute.xlu0 15
  %1888 = vperm.xlu0 %1887, %v270
  %v1889 = vpop.permute.xlu0 %1888
  %1892 = vset.pattern.permute.xlu0 15
  %1893 = vperm.xlu0 %1892, %v271
  %v1894 = vpop.permute.xlu0 %1893
  %1897 = vset.pattern.permute.xlu0 15
  %1898 = vperm.xlu0 %1897, %v272
  %v1899 = vpop.permute.xlu0 %1898
  %1902 = vset.pattern.permute.xlu0 15
  %1903 = vperm.xlu0 %1902, %v273
  %v1904 = vpop.permute.xlu0 %1903
  %1907 = vset.pattern.permute.xlu0 15
  %1908 = vperm.xlu0 %1907, %v274
  %v1909 = vpop.permute.xlu0 %1908
  %1912 = vset.pattern.permute.xlu0 15
  %1913 = vperm.xlu0 %1912, %v275
  %v1914 = vpop.permute.xlu0 %1913
  %1917 = vset.pattern.permute.xlu0 15
  %1918 = vperm.xlu0 %1917, %v276
  %v1919 = vpop.permute.xlu0 %1918
  %1922 = vset.pattern.permute.xlu0 15
  %1923 = vperm.xlu0 %1922, %v277
  %v1924 = vpop.permute.xlu0 %1923
  %1927 = vset.pattern.permute.xlu0 15
  %1928 = vperm.xlu0 %1927, %v278
  %v1929 = vpop.permute.xlu0 %1928
  %1932 = vset.pattern.permute.xlu0 15
  %1933 = vperm.xlu0 %1932, %v279
  %v1934 = vpop.permute.xlu0 %1933
  %1937 = vset.pattern.permute.xlu0 15
  %1938 = vperm.xlu0 %1937, %v280
  %v1939 = vpop.permute.xlu0 %1938
  %1942 = vset.pattern.permute.xlu0 15
  %1943 = vperm.xlu0 %1942, %v281
  %v1944 = vpop.permute.xlu0 %1943
  %1947 = vset.pattern.permute.xlu0 15
  %1948 = vperm.xlu0 %1947, %v282
  %v1949 = vpop.permute.xlu0 %1948
  %1952 = vset.pattern.permute.xlu0 15
  %1953 = vperm.xlu0 %1952, %v283
  %v1954 = vpop.permute.xlu0 %1953
  %1957 = vset.pattern.permute.xlu0 15
  %1958 = vperm.xlu0 %1957, %v284
  %v1959 = vpop.permute.xlu0 %1958
  %1962 = vset.pattern.permute.xlu0 15
  %1963 = vperm.xlu0 %1962, %v285
  %v1964 = vpop.permute.xlu0 %1963
  %1967 = vset.pattern.permute.xlu0 15
  %1968 = vperm.xlu0 %1967, %v286
  %v1969 = vpop.permute.xlu0 %1968
  %1972 = vset.pattern.permute.xlu0 15
  %1973 = vperm.xlu0 %1972, %v287
  %v1974 = vpop.permute.xlu0 %1973
  %1977 = vset.pattern.permute.xlu0 15
  %1978 = vperm.xlu0 %1977, %v288
  %v1979 = vpop.permute.xlu0 %1978
  %1982 = vset.pattern.permute.xlu0 15
  %1983 = vperm.xlu0 %1982, %v289
  %v1984 = vpop.permute.xlu0 %1983
  %1987 = vset.pattern.permute.xlu0 15
  %1988 = vperm.xlu0 %1987, %v290
  %v1989 = vpop.permute.xlu0 %1988
  %1992 = vset.pattern.permute.xlu0 15
  %1993 = vperm.xlu0 %1992, %v291
  %v1994 = vpop.permute.xlu0 %1993
  %1997 = vset.pattern.permute.xlu0 15
  %1998 = vperm.xlu0 %1997, %v292
  %v1999 = vpop.permute.xlu0 %1998
  %2002 = vset.pattern.permute.xlu0 15
  %2003 = vperm.xlu0 %2002, %v293
  %v2004 = vpop.permute.xlu0 %2003
  %2007 = vset.pattern.permute.xlu0 15
  %2008 = vperm.xlu0 %2007, %v294
  %v2009 = vpop.permute.xlu0 %2008
  %2012 = vset.pattern.permute.xlu0 15
  %2013 = vperm.xlu0 %2012, %v295
  %v2014 = vpop.permute.xlu0 %2013
  %2017 = vset.pattern.permute.xlu0 15
  %2018 = vperm.xlu0 %2017, %v296
  %v2019 = vpop.permute.xlu0 %2018
  %2022 = vset.pattern.permute.xlu0 15
  %2023 = vperm.xlu0 %2022, %v297
  %v2024 = vpop.permute.xlu0 %2023
  %2027 = vset.pattern.permute.xlu0 15
  %2028 = vperm.xlu0 %2027, %v298
  %v2029 = vpop.permute.xlu0 %2028
  %2032 = vset.pattern.permute.xlu0 15
  %2033 = vperm.xlu0 %2032, %v299
  %v2034 = vpop.permute.xlu0 %2033
  %2037 = vset.pattern.permute.xlu0 15
  %2038 = vperm.xlu0 %2037, %v300
  %v2039 = vpop.permute.xlu0 %2038
  %2042 = vset.pattern.permute.xlu0 15
  %2043 = vperm.xlu0 %2042, %v301
  %v2044 = vpop.permute.xlu0 %2043
  %2047 = vset.pattern.permute.xlu0 15
  %2048 = vperm.xlu0 %2047, %v302
  %v2049 = vpop.permute.xlu0 %2048
  %2052 = vset.pattern.permute.xlu0 15
  %2053 = vperm.xlu0 %2052, %v303
  %v2054 = vpop.permute.xlu0 %2053
  %2057 = vset.pattern.permute.xlu0 15
  %2058 = vperm.xlu0 %2057, %v304
  %v2059 = vpop.permute.xlu0 %2058
  %2062 = vset.pattern.permute.xlu0 15
  %2063 = vperm.xlu0 %2062, %v305
  %v2064 = vpop.permute.xlu0 %2063
  %2067 = vset.pattern.permute.xlu0 15
  %2068 = vperm.xlu0 %2067, %v306
  %v2069 = vpop.permute.xlu0 %2068
  %2072 = vset.pattern.permute.xlu0 15
  %2073 = vperm.xlu0 %2072, %v307
  %v2074 = vpop.permute.xlu0 %2073
  %2077 = vset.pattern.permute.xlu0 15
  %2078 = vperm.xlu0 %2077, %v308
  %v2079 = vpop.permute.xlu0 %2078
  %2082 = vset.pattern.permute.xlu0 15
  %2083 = vperm.xlu0 %2082, %v309
  %v2084 = vpop.permute.xlu0 %2083
  %2087 = vset.pattern.permute.xlu0 15
  %2088 = vperm.xlu0 %2087, %v310
  %v2089 = vpop.permute.xlu0 %2088
  %2092 = vset.pattern.permute.xlu0 15
  %2093 = vperm.xlu0 %2092, %v311
  %v2094 = vpop.permute.xlu0 %2093
  %2097 = vset.pattern.permute.xlu0 15
  %2098 = vperm.xlu0 %2097, %v312
  %v2099 = vpop.permute.xlu0 %2098
  %2102 = vset.pattern.permute.xlu0 15
  %2103 = vperm.xlu0 %2102, %v313
  %v2104 = vpop.permute.xlu0 %2103
  %2107 = vset.pattern.permute.xlu0 15
  %2108 = vperm.xlu0 %2107, %v314
  %v2109 = vpop.permute.xlu0 %2108
  %2112 = vset.pattern.permute.xlu0 15
  %2113 = vperm.xlu0 %2112, %v315
  %v2114 = vpop.permute.xlu0 %2113
  %2117 = vset.pattern.permute.xlu0 15
  %2118 = vperm.xlu0 %2117, %v316
  %v2119 = vpop.permute.xlu0 %2118
  %2122 = vset.pattern.permute.xlu0 15
  %2123 = vperm.xlu0 %2122, %v317
  %v2124 = vpop.permute.xlu0 %2123
  %2127 = vset.pattern.permute.xlu0 15
  %2128 = vperm.xlu0 %2127, %v318
  %v2129 = vpop.permute.xlu0 %2128
  %2132 = vset.pattern.permute.xlu0 15
  %2133 = vperm.xlu0 %2132, %v319
  %v2134 = vpop.permute.xlu0 %2133
  %2137 = vset.pattern.permute.xlu0 15
  %2138 = vperm.xlu0 %2137, %v320
  %v2139 = vpop.permute.xlu0 %2138
  %2142 = vset.pattern.permute.xlu0 15
  %2143 = vperm.xlu0 %2142, %v321
  %v2144 = vpop.permute.xlu0 %2143
  %2147 = vset.pattern.permute.xlu0 15
  %2148 = vperm.xlu0 %2147, %v322
  %v2149 = vpop.permute.xlu0 %2148
  %2152 = vset.pattern.permute.xlu0 15
  %2153 = vperm.xlu0 %2152, %v323
  %v2154 = vpop.permute.xlu0 %2153
  %2157 = vset.pattern.permute.xlu0 15
  %2158 = vperm.xlu0 %2157, %v324
  %v2159 = vpop.permute.xlu0 %2158
  %2162 = vset.pattern.permute.xlu0 15
  %2163 = vperm.xlu0 %2162, %v325
  %v2164 = vpop.permute.xlu0 %2163
  %2167 = vset.pattern.permute.xlu0 15
  %2168 = vperm.xlu0 %2167, %v326
  %v2169 = vpop.permute.xlu0 %2168
  %2172 = vset.pattern.permute.xlu0 15
  %2173 = vperm.xlu0 %2172, %v327
  %v2174 = vpop.permute.xlu0 %2173
  %2177 = vset.pattern.permute.xlu0 15
  %2178 = vperm.xlu0 %2177, %v328
  %v2179 = vpop.permute.xlu0 %2178
  %2182 = vset.pattern.permute.xlu0 15
  %2183 = vperm.xlu0 %2182, %v329
  %v2184 = vpop.permute.xlu0 %2183
  %2187 = vset.pattern.permute.xlu0 15
  %2188 = vperm.xlu0 %2187, %v330
  %v2189 = vpop.permute.xlu0 %2188
  %2192 = vset.pattern.permute.xlu0 15
  %2193 = vperm.xlu0 %2192, %v331
  %v2194 = vpop.permute.xlu0 %2193
  %2197 = vset.pattern.permute.xlu0 15
  %2198 = vperm.xlu0 %2197, %v332
  %v2199 = vpop.permute.xlu0 %2198
  %2202 = vset.pattern.permute.xlu0 15
  %2203 = vperm.xlu0 %2202, %v333
  %v2204 = vpop.permute.xlu0 %2203
  %2207 = vset.pattern.permute.xlu0 15
  %2208 = vperm.xlu0 %2207, %v334
  %v2209 = vpop.permute.xlu0 %2208
  %2212 = vset.pattern.permute.xlu0 15
  %2213 = vperm.xlu0 %2212, %v335
  %v2214 = vpop.permute.xlu0 %2213
  %2217 = vset.pattern.permute.xlu0 15
  %2218 = vperm.xlu0 %2217, %v336
  %v2219 = vpop.permute.xlu0 %2218
  %2222 = vset.pattern.permute.xlu0 15
  %2223 = vperm.xlu0 %2222, %v337
  %v2224 = vpop.permute.xlu0 %2223
  %2227 = vset.pattern.permute.xlu0 15
  %2228 = vperm.xlu0 %2227, %v338
  %v2229 = vpop.permute.xlu0 %2228
  %2232 = vset.pattern.permute.xlu0 15
  %2233 = vperm.xlu0 %2232, %v339
  %v2234 = vpop.permute.xlu0 %2233
  %2237 = vset.pattern.permute.xlu0 15
  %2238 = vperm.xlu0 %2237, %v340
  %v2239 = vpop.permute.xlu0 %2238
  %2242 = vset.pattern.permute.xlu0 15
  %2243 = vperm.xlu0 %2242, %v341
  %v2244 = vpop.permute.xlu0 %2243
  %2247 = vset.pattern.permute.xlu0 15
  %2248 = vperm.xlu0 %2247, %v342
  %v2249 = vpop.permute.xlu0 %2248
  %2252 = vset.pattern.permute.xlu0 15
  %2253 = vperm.xlu0 %2252, %v343
  %v2254 = vpop.permute.xlu0 %2253
  %2257 = vset.pattern.permute.xlu0 15
  %2258 = vperm.xlu0 %2257, %v344
  %v2259 = vpop.permute.xlu0 %2258
  %2262 = vset.pattern.permute.xlu0 15
  %2263 = vperm.xlu0 %2262, %v345
  %v2264 = vpop.permute.xlu0 %2263
  %2267 = vset.pattern.permute.xlu0 15
  %2268 = vperm.xlu0 %2267, %v346
  %v2269 = vpop.permute.xlu0 %2268
  %2272 = vset.pattern.permute.xlu0 15
  %2273 = vperm.xlu0 %2272, %v347
  %v2274 = vpop.permute.xlu0 %2273
  %2277 = vset.pattern.permute.xlu0 15
  %2278 = vperm.xlu0 %2277, %v348
  %v2279 = vpop.permute.xlu0 %2278
  %2282 = vset.pattern.permute.xlu0 15
  %2283 = vperm.xlu0 %2282, %v349
  %v2284 = vpop.permute.xlu0 %2283
  %2287 = vset.pattern.permute.xlu0 15
  %2288 = vperm.xlu0 %2287, %v350
  %v2289 = vpop.permute.xlu0 %2288
  %2292 = vset.pattern.permute.xlu0 15
  %2293 = vperm.xlu0 %2292, %v351
  %v2294 = vpop.permute.xlu0 %2293
  %2297 = vset.pattern.permute.xlu0 15
  %2298 = vperm.xlu0 %2297, %v352
  %v2299 = vpop.permute.xlu0 %2298
  %2302 = vset.pattern.permute.xlu0 15
  %2303 = vperm.xlu0 %2302, %v353
  %v2304 = vpop.permute.xlu0 %2303
  %2307 = vset.pattern.permute.xlu0 15
  %2308 = vperm.xlu0 %2307, %v354
  %v2309 = vpop.permute.xlu0 %2308
  %2312 = vset.pattern.permute.xlu0 15
  %2313 = vperm.xlu0 %2312, %v355
  %v2314 = vpop.permute.xlu0 %2313
  %2317 = vset.pattern.permute.xlu0 15
  %2318 = vperm.xlu0 %2317, %v356
  %v2319 = vpop.permute.xlu0 %2318
  %2322 = vset.pattern.permute.xlu0 15
  %2323 = vperm.xlu0 %2322, %v357
  %v2324 = vpop.permute.xlu0 %2323
  %2327 = vset.pattern.permute.xlu0 15
  %2328 = vperm.xlu0 %2327, %v358
  %v2329 = vpop.permute.xlu0 %2328
  %2332 = vset.pattern.permute.xlu0 15
  %2333 = vperm.xlu0 %2332, %v359
  %v2334 = vpop.permute.xlu0 %2333
  %2337 = vset.pattern.permute.xlu0 15
  %2338 = vperm.xlu0 %2337, %v360
  %v2339 = vpop.permute.xlu0 %2338
  %2342 = vset.pattern.permute.xlu0 15
  %2343 = vperm.xlu0 %2342, %v361
  %v2344 = vpop.permute.xlu0 %2343
  %2347 = vset.pattern.permute.xlu0 15
  %2348 = vperm.xlu0 %2347, %v362
  %v2349 = vpop.permute.xlu0 %2348
  %2352 = vset.pattern.permute.xlu0 15
  %2353 = vperm.xlu0 %2352, %v363
  %v2354 = vpop.permute.xlu0 %2353
  %2357 = vset.pattern.permute.xlu0 15
  %2358 = vperm.xlu0 %2357, %v364
  %v2359 = vpop.permute.xlu0 %2358
  %2362 = vset.pattern.permute.xlu0 15
  %2363 = vperm.xlu0 %2362, %v365
  %v2364 = vpop.permute.xlu0 %2363
  %2367 = vset.pattern.permute.xlu0 15
  %2368 = vperm.xlu0 %2367, %v366
  %v2369 = vpop.permute.xlu0 %2368
  %2372 = vset.pattern.permute.xlu0 15
  %2373 = vperm.xlu0 %2372, %v367
  %v2374 = vpop.permute.xlu0 %2373
  %2377 = vset.pattern.permute.xlu0 15
  %2378 = vperm.xlu0 %2377, %v368
  %v2379 = vpop.permute.xlu0 %2378
  %2382 = vset.pattern.permute.xlu0 15
  %2383 = vperm.xlu0 %2382, %v369
  %v2384 = vpop.permute.xlu0 %2383
  %2387 = vset.pattern.permute.xlu0 15
  %2388 = vperm.xlu0 %2387, %v370
  %v2389 = vpop.permute.xlu0 %2388
  %2392 = vset.pattern.permute.xlu0 15
  %2393 = vperm.xlu0 %2392, %v371
  %v2394 = vpop.permute.xlu0 %2393
  %2397 = vset.pattern.permute.xlu0 15
  %2398 = vperm.xlu0 %2397, %v372
  %v2399 = vpop.permute.xlu0 %2398
  %2402 = vset.pattern.permute.xlu0 15
  %2403 = vperm.xlu0 %2402, %v373
  %v2404 = vpop.permute.xlu0 %2403
  %2407 = vset.pattern.permute.xlu0 15
  %2408 = vperm.xlu0 %2407, %v374
  %v2409 = vpop.permute.xlu0 %2408
  %2412 = vset.pattern.permute.xlu0 15
  %2413 = vperm.xlu0 %2412, %v375
  %v2414 = vpop.permute.xlu0 %2413
  %2417 = vset.pattern.permute.xlu0 15
  %2418 = vperm.xlu0 %2417, %v376
  %v2419 = vpop.permute.xlu0 %2418
  %2422 = vset.pattern.permute.xlu0 15
  %2423 = vperm.xlu0 %2422, %v377
  %v2424 = vpop.permute.xlu0 %2423
  %2427 = vset.pattern.permute.xlu0 15
  %2428 = vperm.xlu0 %2427, %v378
  %v2429 = vpop.permute.xlu0 %2428
  %2432 = vset.pattern.permute.xlu0 15
  %2433 = vperm.xlu0 %2432, %v379
  %v2434 = vpop.permute.xlu0 %2433
  %2437 = vset.pattern.permute.xlu0 15
  %2438 = vperm.xlu0 %2437, %v380
  %v2439 = vpop.permute.xlu0 %2438
  %2442 = vset.pattern.permute.xlu0 15
  %2443 = vperm.xlu0 %2442, %v381
  %v2444 = vpop.permute.xlu0 %2443
  %2447 = vset.pattern.permute.xlu0 15
  %2448 = vperm.xlu0 %2447, %v382
  %v2449 = vpop.permute.xlu0 %2448
  %2452 = vset.pattern.permute.xlu0 15
  %2453 = vperm.xlu0 %2452, %v383
  %v2454 = vpop.permute.xlu0 %2453
  %2457 = vset.pattern.permute.xlu0 15
  %2458 = vperm.xlu0 %2457, %v384
  %v2459 = vpop.permute.xlu0 %2458
  %2462 = vset.pattern.permute.xlu0 15
  %2463 = vperm.xlu0 %2462, %v385
  %v2464 = vpop.permute.xlu0 %2463
  %2467 = vset.pattern.permute.xlu0 15
  %2468 = vperm.xlu0 %2467, %v386
  %v2469 = vpop.permute.xlu0 %2468
  %2472 = vset.pattern.permute.xlu0 15
  %2473 = vperm.xlu0 %2472, %v387
  %v2474 = vpop.permute.xlu0 %2473
  %2477 = vset.pattern.permute.xlu0 15
  %2478 = vperm.xlu0 %2477, %v388
  %v2479 = vpop.permute.xlu0 %2478
  %2482 = vset.pattern.permute.xlu0 15
  %2483 = vperm.xlu0 %2482, %v389
  %v2484 = vpop.permute.xlu0 %2483
  %2487 = vset.pattern.permute.xlu0 15
  %2488 = vperm.xlu0 %2487, %v390
  %v2489 = vpop.permute.xlu0 %2488
  %2492 = vset.pattern.permute.xlu0 15
  %2493 = vperm.xlu0 %2492, %v391
  %v2494 = vpop.permute.xlu0 %2493
  %2497 = vset.pattern.permute.xlu0 15
  %2498 = vperm.xlu0 %2497, %v392
  %v2499 = vpop.permute.xlu0 %2498
  %2502 = vset.pattern.permute.xlu0 15
  %2503 = vperm.xlu0 %2502, %v393
  %v2504 = vpop.permute.xlu0 %2503
  %2507 = vset.pattern.permute.xlu0 15
  %2508 = vperm.xlu0 %2507, %v394
  %v2509 = vpop.permute.xlu0 %2508
  %2512 = vset.pattern.permute.xlu0 15
  %2513 = vperm.xlu0 %2512, %v395
  %v2514 = vpop.permute.xlu0 %2513
  %2517 = vset.pattern.permute.xlu0 15
  %2518 = vperm.xlu0 %2517, %v396
  %v2519 = vpop.permute.xlu0 %2518
  %2522 = vset.pattern.permute.xlu0 15
  %2523 = vperm.xlu0 %2522, %v397
  %v2524 = vpop.permute.xlu0 %2523
  %v2526 = vmul.f32 %v1758, %v1889
  %v2527 = vmul.f32 %v1759, %v1894
  %v2528 = vmul.f32 %v1760, %v1899
  %v2529 = vmul.f32 %v1761, %v1904
  %v2530 = vmul.f32 %v1762, %v1909
  %v2531 = vmul.f32 %v1763, %v1914
  %v2532 = vmul.f32 %v1764, %v1919
  %v2533 = vmul.f32 %v1765, %v1924
  %v2534 = vmul.f32 %v1766, %v1929
  %v2535 = vmul.f32 %v1767, %v1934
  %v2536 = vmul.f32 %v1768, %v1939
  %v2537 = vmul.f32 %v1769, %v1944
  %v2538 = vmul.f32 %v1770, %v1949
  %v2539 = vmul.f32 %v1771, %v1954
  %v2540 = vmul.f32 %v1772, %v1959
  %v2541 = vmul.f32 %v1773, %v1964
  %v2542 = vmul.f32 %v1774, %v1969
  %v2543 = vmul.f32 %v1775, %v1974
  %v2544 = vmul.f32 %v1776, %v1979
  %v2545 = vmul.f32 %v1777, %v1984
  %v2546 = vmul.f32 %v1778, %v1989
  %v2547 = vmul.f32 %v1779, %v1994
  %v2548 = vmul.f32 %v1780, %v1999
  %v2549 = vmul.f32 %v1781, %v2004
  %v2550 = vmul.f32 %v1782, %v2009
  %v2551 = vmul.f32 %v1783, %v2014
  %v2552 = vmul.f32 %v1784, %v2019
  %v2553 = vmul.f32 %v1785, %v2024
  %v2554 = vmul.f32 %v1786, %v2029
  %v2555 = vmul.f32 %v1787, %v2034
  %v2556 = vmul.f32 %v1788, %v2039
  %v2557 = vmul.f32 %v1789, %v2044
  %v2558 = vmul.f32 %v1790, %v2049
  %v2559 = vmul.f32 %v1791, %v2054
  %v2560 = vmul.f32 %v1792, %v2059
  %v2561 = vmul.f32 %v1793, %v2064
  %v2562 = vmul.f32 %v1794, %v2069
  %v2563 = vmul.f32 %v1795, %v2074
  %v2564 = vmul.f32 %v1796, %v2079
  %v2565 = vmul.f32 %v1797, %v2084
  %v2566 = vmul.f32 %v1798, %v2089
  %v2567 = vmul.f32 %v1799, %v2094
  %v2568 = vmul.f32 %v1800, %v2099
  %v2569 = vmul.f32 %v1801, %v2104
  %v2570 = vmul.f32 %v1802, %v2109
  %v2571 = vmul.f32 %v1803, %v2114
  %v2572 = vmul.f32 %v1804, %v2119
  %v2573 = vmul.f32 %v1805, %v2124
  %v2574 = vmul.f32 %v1806, %v2129
  %v2575 = vmul.f32 %v1807, %v2134
  %v2576 = vmul.f32 %v1808, %v2139
  %v2577 = vmul.f32 %v1809, %v2144
  %v2578 = vmul.f32 %v1810, %v2149
  %v2579 = vmul.f32 %v1811, %v2154
  %v2580 = vmul.f32 %v1812, %v2159
  %v2581 = vmul.f32 %v1813, %v2164
  %v2582 = vmul.f32 %v1814, %v2169
  %v2583 = vmul.f32 %v1815, %v2174
  %v2584 = vmul.f32 %v1816, %v2179
  %v2585 = vmul.f32 %v1817, %v2184
  %v2586 = vmul.f32 %v1818, %v2189
  %v2587 = vmul.f32 %v1819, %v2194
  %v2588 = vmul.f32 %v1820, %v2199
  %v2589 = vmul.f32 %v1821, %v2204
  %v2590 = vmul.f32 %v1822, %v2209
  %v2591 = vmul.f32 %v1823, %v2214
  %v2592 = vmul.f32 %v1824, %v2219
  %v2593 = vmul.f32 %v1825, %v2224
  %v2594 = vmul.f32 %v1826, %v2229
  %v2595 = vmul.f32 %v1827, %v2234
  %v2596 = vmul.f32 %v1828, %v2239
  %v2597 = vmul.f32 %v1829, %v2244
  %v2598 = vmul.f32 %v1830, %v2249
  %v2599 = vmul.f32 %v1831, %v2254
  %v2600 = vmul.f32 %v1832, %v2259
  %v2601 = vmul.f32 %v1833, %v2264
  %v2602 = vmul.f32 %v1834, %v2269
  %v2603 = vmul.f32 %v1835, %v2274
  %v2604 = vmul.f32 %v1836, %v2279
  %v2605 = vmul.f32 %v1837, %v2284
  %v2606 = vmul.f32 %v1838, %v2289
  %v2607 = vmul.f32 %v1839, %v2294
  %v2608 = vmul.f32 %v1840, %v2299
  %v2609 = vmul.f32 %v1841, %v2304
  %v2610 = vmul.f32 %v1842, %v2309
  %v2611 = vmul.f32 %v1843, %v2314
  %v2612 = vmul.f32 %v1844, %v2319
  %v2613 = vmul.f32 %v1845, %v2324
  %v2614 = vmul.f32 %v1846, %v2329
  %v2615 = vmul.f32 %v1847, %v2334
  %v2616 = vmul.f32 %v1848, %v2339
  %v2617 = vmul.f32 %v1849, %v2344
  %v2618 = vmul.f32 %v1850, %v2349
  %v2619 = vmul.f32 %v1851, %v2354
  %v2620 = vmul.f32 %v1852, %v2359
  %v2621 = vmul.f32 %v1853, %v2364
  %v2622 = vmul.f32 %v1854, %v2369
  %v2623 = vmul.f32 %v1855, %v2374
  %v2624 = vmul.f32 %v1856, %v2379
  %v2625 = vmul.f32 %v1857, %v2384
  %v2626 = vmul.f32 %v1858, %v2389
  %v2627 = vmul.f32 %v1859, %v2394
  %v2628 = vmul.f32 %v1860, %v2399
  %v2629 = vmul.f32 %v1861, %v2404
  %v2630 = vmul.f32 %v1862, %v2409
  %v2631 = vmul.f32 %v1863, %v2414
  %v2632 = vmul.f32 %v1864, %v2419
  %v2633 = vmul.f32 %v1865, %v2424
  %v2634 = vmul.f32 %v1866, %v2429
  %v2635 = vmul.f32 %v1867, %v2434
  %v2636 = vmul.f32 %v1868, %v2439
  %v2637 = vmul.f32 %v1869, %v2444
  %v2638 = vmul.f32 %v1870, %v2449
  %v2639 = vmul.f32 %v1871, %v2454
  %v2640 = vmul.f32 %v1872, %v2459
  %v2641 = vmul.f32 %v1873, %v2464
  %v2642 = vmul.f32 %v1874, %v2469
  %v2643 = vmul.f32 %v1875, %v2474
  %v2644 = vmul.f32 %v1876, %v2479
  %v2645 = vmul.f32 %v1877, %v2484
  %v2646 = vmul.f32 %v1878, %v2489
  %v2647 = vmul.f32 %v1879, %v2494
  %v2648 = vmul.f32 %v1880, %v2499
  %v2649 = vmul.f32 %v1881, %v2504
  %v2650 = vmul.f32 %v1882, %v2509
  %v2651 = vmul.f32 %v1883, %v2514
  %v2652 = vmul.f32 %v1884, %v2519
  %v2653 = vmul.f32 %v1885, %v2524
  %vm2654 = vcmask 252928
  %2655 = vst.msk [vmem:[%s3] sm:$0xff] %vm2654, %v2526
  %2656 = vst.msk [vmem:[%s3 + $0x8] sm:$0xff] %vm2654, %v2527
  %2657 = vst.msk [vmem:[%s3 + $0x10] sm:$0xff] %vm2654, %v2528
  %2658 = vst.msk [vmem:[%s3 + $0x18] sm:$0xff] %vm2654, %v2529
  %2659 = vst.msk [vmem:[%s3 + $0x20] sm:$0xff] %vm2654, %v2530
  %2660 = vst.msk [vmem:[%s3 + $0x28] sm:$0xff] %vm2654, %v2531
  %2661 = vst.msk [vmem:[%s3 + $0x30] sm:$0xff] %vm2654, %v2532
  %2662 = vst.msk [vmem:[%s3 + $0x38] sm:$0xff] %vm2654, %v2533
  %2663 = vst.msk [vmem:[%s3 + $0x40] sm:$0xff] %vm2654, %v2534
  %2664 = vst.msk [vmem:[%s3 + $0x48] sm:$0xff] %vm2654, %v2535
  %2665 = vst.msk [vmem:[%s3 + $0x50] sm:$0xff] %vm2654, %v2536
  %2666 = vst.msk [vmem:[%s3 + $0x58] sm:$0xff] %vm2654, %v2537
  %2667 = vst.msk [vmem:[%s3 + $0x60] sm:$0xff] %vm2654, %v2538
  %2668 = vst.msk [vmem:[%s3 + $0x68] sm:$0xff] %vm2654, %v2539
  %2669 = vst.msk [vmem:[%s3 + $0x70] sm:$0xff] %vm2654, %v2540
  %2670 = vst.msk [vmem:[%s3 + $0x78] sm:$0xff] %vm2654, %v2541
  %2671 = vst.msk [vmem:[%s3 + $0x80] sm:$0xff] %vm2654, %v2542
  %2672 = vst.msk [vmem:[%s3 + $0x88] sm:$0xff] %vm2654, %v2543
  %2673 = vst.msk [vmem:[%s3 + $0x90] sm:$0xff] %vm2654, %v2544
  %2674 = vst.msk [vmem:[%s3 + $0x98] sm:$0xff] %vm2654, %v2545
  %2675 = vst.msk [vmem:[%s3 + $0xa0] sm:$0xff] %vm2654, %v2546
  %2676 = vst.msk [vmem:[%s3 + $0xa8] sm:$0xff] %vm2654, %v2547
  %2677 = vst.msk [vmem:[%s3 + $0xb0] sm:$0xff] %vm2654, %v2548
  %2678 = vst.msk [vmem:[%s3 + $0xb8] sm:$0xff] %vm2654, %v2549
  %2679 = vst.msk [vmem:[%s3 + $0xc0] sm:$0xff] %vm2654, %v2550
  %2680 = vst.msk [vmem:[%s3 + $0xc8] sm:$0xff] %vm2654, %v2551
  %2681 = vst.msk [vmem:[%s3 + $0xd0] sm:$0xff] %vm2654, %v2552
  %2682 = vst.msk [vmem:[%s3 + $0xd8] sm:$0xff] %vm2654, %v2553
  %2683 = vst.msk [vmem:[%s3 + $0xe0] sm:$0xff] %vm2654, %v2554
  %2684 = vst.msk [vmem:[%s3 + $0xe8] sm:$0xff] %vm2654, %v2555
  %2685 = vst.msk [vmem:[%s3 + $0xf0] sm:$0xff] %vm2654, %v2556
  %2686 = vst.msk [vmem:[%s3 + $0xf8] sm:$0xff] %vm2654, %v2557
  %2687 = vst.msk [vmem:[%s3 + $0x100] sm:$0xff] %vm2654, %v2558
  %2688 = vst.msk [vmem:[%s3 + $0x108] sm:$0xff] %vm2654, %v2559
  %2689 = vst.msk [vmem:[%s3 + $0x110] sm:$0xff] %vm2654, %v2560
  %2690 = vst.msk [vmem:[%s3 + $0x118] sm:$0xff] %vm2654, %v2561
  %2691 = vst.msk [vmem:[%s3 + $0x120] sm:$0xff] %vm2654, %v2562
  %2692 = vst.msk [vmem:[%s3 + $0x128] sm:$0xff] %vm2654, %v2563
  %2693 = vst.msk [vmem:[%s3 + $0x130] sm:$0xff] %vm2654, %v2564
  %2694 = vst.msk [vmem:[%s3 + $0x138] sm:$0xff] %vm2654, %v2565
  %2695 = vst.msk [vmem:[%s3 + $0x140] sm:$0xff] %vm2654, %v2566
  %2696 = vst.msk [vmem:[%s3 + $0x148] sm:$0xff] %vm2654, %v2567
  %2697 = vst.msk [vmem:[%s3 + $0x150] sm:$0xff] %vm2654, %v2568
  %2698 = vst.msk [vmem:[%s3 + $0x158] sm:$0xff] %vm2654, %v2569
  %2699 = vst.msk [vmem:[%s3 + $0x160] sm:$0xff] %vm2654, %v2570
  %2700 = vst.msk [vmem:[%s3 + $0x168] sm:$0xff] %vm2654, %v2571
  %2701 = vst.msk [vmem:[%s3 + $0x170] sm:$0xff] %vm2654, %v2572
  %2702 = vst.msk [vmem:[%s3 + $0x178] sm:$0xff] %vm2654, %v2573
  %2703 = vst.msk [vmem:[%s3 + $0x180] sm:$0xff] %vm2654, %v2574
  %2704 = vst.msk [vmem:[%s3 + $0x188] sm:$0xff] %vm2654, %v2575
  %2705 = vst.msk [vmem:[%s3 + $0x190] sm:$0xff] %vm2654, %v2576
  %2706 = vst.msk [vmem:[%s3 + $0x198] sm:$0xff] %vm2654, %v2577
  %2707 = vst.msk [vmem:[%s3 + $0x1a0] sm:$0xff] %vm2654, %v2578
  %2708 = vst.msk [vmem:[%s3 + $0x1a8] sm:$0xff] %vm2654, %v2579
  %2709 = vst.msk [vmem:[%s3 + $0x1b0] sm:$0xff] %vm2654, %v2580
  %2710 = vst.msk [vmem:[%s3 + $0x1b8] sm:$0xff] %vm2654, %v2581
  %2711 = vst.msk [vmem:[%s3 + $0x1c0] sm:$0xff] %vm2654, %v2582
  %2712 = vst.msk [vmem:[%s3 + $0x1c8] sm:$0xff] %vm2654, %v2583
  %2713 = vst.msk [vmem:[%s3 + $0x1d0] sm:$0xff] %vm2654, %v2584
  %2714 = vst.msk [vmem:[%s3 + $0x1d8] sm:$0xff] %vm2654, %v2585
  %2715 = vst.msk [vmem:[%s3 + $0x1e0] sm:$0xff] %vm2654, %v2586
  %2716 = vst.msk [vmem:[%s3 + $0x1e8] sm:$0xff] %vm2654, %v2587
  %2717 = vst.msk [vmem:[%s3 + $0x1f0] sm:$0xff] %vm2654, %v2588
  %2718 = vst.msk [vmem:[%s3 + $0x1f8] sm:$0xff] %vm2654, %v2589
  %2719 = vst.msk [vmem:[%s3 + $0x200] sm:$0xff] %vm2654, %v2590
  %2720 = vst.msk [vmem:[%s3 + $0x208] sm:$0xff] %vm2654, %v2591
  %2721 = vst.msk [vmem:[%s3 + $0x210] sm:$0xff] %vm2654, %v2592
  %2722 = vst.msk [vmem:[%s3 + $0x218] sm:$0xff] %vm2654, %v2593
  %2723 = vst.msk [vmem:[%s3 + $0x220] sm:$0xff] %vm2654, %v2594
  %2724 = vst.msk [vmem:[%s3 + $0x228] sm:$0xff] %vm2654, %v2595
  %2725 = vst.msk [vmem:[%s3 + $0x230] sm:$0xff] %vm2654, %v2596
  %2726 = vst.msk [vmem:[%s3 + $0x238] sm:$0xff] %vm2654, %v2597
  %2727 = vst.msk [vmem:[%s3 + $0x240] sm:$0xff] %vm2654, %v2598
  %2728 = vst.msk [vmem:[%s3 + $0x248] sm:$0xff] %vm2654, %v2599
  %2729 = vst.msk [vmem:[%s3 + $0x250] sm:$0xff] %vm2654, %v2600
  %2730 = vst.msk [vmem:[%s3 + $0x258] sm:$0xff] %vm2654, %v2601
  %2731 = vst.msk [vmem:[%s3 + $0x260] sm:$0xff] %vm2654, %v2602
  %2732 = vst.msk [vmem:[%s3 + $0x268] sm:$0xff] %vm2654, %v2603
  %2733 = vst.msk [vmem:[%s3 + $0x270] sm:$0xff] %vm2654, %v2604
  %2734 = vst.msk [vmem:[%s3 + $0x278] sm:$0xff] %vm2654, %v2605
  %2735 = vst.msk [vmem:[%s3 + $0x280] sm:$0xff] %vm2654, %v2606
  %2736 = vst.msk [vmem:[%s3 + $0x288] sm:$0xff] %vm2654, %v2607
  %2737 = vst.msk [vmem:[%s3 + $0x290] sm:$0xff] %vm2654, %v2608
  %2738 = vst.msk [vmem:[%s3 + $0x298] sm:$0xff] %vm2654, %v2609
  %2739 = vst.msk [vmem:[%s3 + $0x2a0] sm:$0xff] %vm2654, %v2610
  %2740 = vst.msk [vmem:[%s3 + $0x2a8] sm:$0xff] %vm2654, %v2611
  %2741 = vst.msk [vmem:[%s3 + $0x2b0] sm:$0xff] %vm2654, %v2612
  %2742 = vst.msk [vmem:[%s3 + $0x2b8] sm:$0xff] %vm2654, %v2613
  %2743 = vst.msk [vmem:[%s3 + $0x2c0] sm:$0xff] %vm2654, %v2614
  %2744 = vst.msk [vmem:[%s3 + $0x2c8] sm:$0xff] %vm2654, %v2615
  %2745 = vst.msk [vmem:[%s3 + $0x2d0] sm:$0xff] %vm2654, %v2616
  %2746 = vst.msk [vmem:[%s3 + $0x2d8] sm:$0xff] %vm2654, %v2617
  %2747 = vst.msk [vmem:[%s3 + $0x2e0] sm:$0xff] %vm2654, %v2618
  %2748 = vst.msk [vmem:[%s3 + $0x2e8] sm:$0xff] %vm2654, %v2619
  %2749 = vst.msk [vmem:[%s3 + $0x2f0] sm:$0xff] %vm2654, %v2620
  %2750 = vst.msk [vmem:[%s3 + $0x2f8] sm:$0xff] %vm2654, %v2621
  %2751 = vst.msk [vmem:[%s3 + $0x300] sm:$0xff] %vm2654, %v2622
  %2752 = vst.msk [vmem:[%s3 + $0x308] sm:$0xff] %vm2654, %v2623
  %2753 = vst.msk [vmem:[%s3 + $0x310] sm:$0xff] %vm2654, %v2624
  %2754 = vst.msk [vmem:[%s3 + $0x318] sm:$0xff] %vm2654, %v2625
  %2755 = vst.msk [vmem:[%s3 + $0x320] sm:$0xff] %vm2654, %v2626
  %2756 = vst.msk [vmem:[%s3 + $0x328] sm:$0xff] %vm2654, %v2627
  %2757 = vst.msk [vmem:[%s3 + $0x330] sm:$0xff] %vm2654, %v2628
  %2758 = vst.msk [vmem:[%s3 + $0x338] sm:$0xff] %vm2654, %v2629
  %2759 = vst.msk [vmem:[%s3 + $0x340] sm:$0xff] %vm2654, %v2630
  %2760 = vst.msk [vmem:[%s3 + $0x348] sm:$0xff] %vm2654, %v2631
  %2761 = vst.msk [vmem:[%s3 + $0x350] sm:$0xff] %vm2654, %v2632
  %2762 = vst.msk [vmem:[%s3 + $0x358] sm:$0xff] %vm2654, %v2633
  %2763 = vst.msk [vmem:[%s3 + $0x360] sm:$0xff] %vm2654, %v2634
  %2764 = vst.msk [vmem:[%s3 + $0x368] sm:$0xff] %vm2654, %v2635
  %2765 = vst.msk [vmem:[%s3 + $0x370] sm:$0xff] %vm2654, %v2636
  %2766 = vst.msk [vmem:[%s3 + $0x378] sm:$0xff] %vm2654, %v2637
  %2767 = vst.msk [vmem:[%s3 + $0x380] sm:$0xff] %vm2654, %v2638
  %2768 = vst.msk [vmem:[%s3 + $0x388] sm:$0xff] %vm2654, %v2639
  %2769 = vst.msk [vmem:[%s3 + $0x390] sm:$0xff] %vm2654, %v2640
  %2770 = vst.msk [vmem:[%s3 + $0x398] sm:$0xff] %vm2654, %v2641
  %2771 = vst.msk [vmem:[%s3 + $0x3a0] sm:$0xff] %vm2654, %v2642
  %2772 = vst.msk [vmem:[%s3 + $0x3a8] sm:$0xff] %vm2654, %v2643
  %2773 = vst.msk [vmem:[%s3 + $0x3b0] sm:$0xff] %vm2654, %v2644
  %2774 = vst.msk [vmem:[%s3 + $0x3b8] sm:$0xff] %vm2654, %v2645
  %2775 = vst.msk [vmem:[%s3 + $0x3c0] sm:$0xff] %vm2654, %v2646
  %2776 = vst.msk [vmem:[%s3 + $0x3c8] sm:$0xff] %vm2654, %v2647
  %2777 = vst.msk [vmem:[%s3 + $0x3d0] sm:$0xff] %vm2654, %v2648
  %2778 = vst.msk [vmem:[%s3 + $0x3d8] sm:$0xff] %vm2654, %v2649
  %2779 = vst.msk [vmem:[%s3 + $0x3e0] sm:$0xff] %vm2654, %v2650
  %2780 = vst.msk [vmem:[%s3 + $0x3e8] sm:$0xff] %vm2654, %v2651
  %2781 = vst.msk [vmem:[%s3 + $0x3f0] sm:$0xff] %vm2654, %v2652
  %2782 = vst.msk [vmem:[%s3 + $0x3f8] sm:$0xff] %vm2654, %v2653
  // Predicated region
  $region14: #{tpu_custom_call.1} parent=0 // pred_check
    _
  $region15: #{tpu_custom_call.1} parent=0 // pred_check_branch
    %2784 = sbr.rel (0) target = $region17
  $region16: #{tpu_custom_call.1} parent=0 // pred_region
    _
  $region17: #{tpu_custom_call.1} parent=0 // pred_fallthru
    _
  // Predicated region
  $region18: #{tpu_custom_call.1} parent=0 // pred_check
    _
  $region19: #{tpu_custom_call.1} parent=0 // pred_check_branch
    %2786 = sbr.rel (0) target = $region21
  $region20: #{tpu_custom_call.1} parent=0 // pred_region
    _
  $region21: #{tpu_custom_call.1} parent=0 // pred_fallthru
    _

</llo_original>
